<compile_context>
chip_gen: v5e
topology: v5e:2x2
jax: 0.10.0
libtpu: 0.0.40
codegen_flags: <defaults>
</compile_context>

<pallas_src>
import functools

import jax
import jax.numpy as jnp
from jax.experimental import pallas as pl
from jax.experimental.pallas import tpu as pltpu

ELU_ALPHA = 1.0
LEAKY_SLOPE = 0.01
FPAD = 128  # common lane-width padding for all (tiny) feature dims


def _round_up(a, b):
    return (a + b - 1) // b * b


def _fused_gcn_kernel(x_ref, a_ref, w_ref, ah_ref, ahw_ref, z_ref, h_a, h_b, *, tm):
    l = pl.program_id(0)  # layer index     (outer, sequential dependency chain)
    i = pl.program_id(1)  # row-tile index  (inner)

    # Seed ping-pong slot "a" with the (padded) input features exactly once.
    @pl.when(jnp.logical_and(l == 0, i == 0))
    def _():
        h_a[...] = x_ref[...]

    row0 = pl.multiple_of(i * tm, tm)
    rows = pl.ds(row0, tm)

    def layer_step(h_prev_ref, h_next_ref):
        # Aggregation: (tm, Npad) @ (Npad, FPAD) on the MXU.
        # A tile is sliced out of the VMEM-resident bf16 copy; {0,1} upcast to f32 is exact.
        a_tile = a_ref[rows, :].astype(jnp.float32)
        temp = jnp.dot(a_tile, h_prev_ref[...], preferred_element_type=jnp.float32)
        # Projection: (tm, FPAD) @ (FPAD, FPAD) on the MXU (zero-padded weight -> exact).
        y = jnp.dot(temp, w_ref[0], preferred_element_type=jnp.float32)

        ah_ref[0] = temp
        ahw_ref[0] = y
        # z block is revisited every layer; the grid is sequential so the final layer's
        # sigmoid(ahw_5) is the value that survives in HBM.
        z_ref[...] = jax.nn.sigmoid(y)

        # Per-layer activation feeding the next layer (layer 5's h is never consumed).
        @pl.when(l == 0)
        def _():
            h_next_ref[rows, :] = jnp.maximum(y, 0.0)                                   # ReLU

        @pl.when(l == 1)
        def _():
            h_next_ref[rows, :] = y * jax.nn.sigmoid(y)                                 # SiLU

        @pl.when(l == 2)
        def _():
            h_next_ref[rows, :] = jnp.where(y > 0, y, ELU_ALPHA * (jnp.exp(y) - 1.0))   # ELU

        @pl.when(l == 3)
        def _():
            h_next_ref[rows, :] = jnp.where(y > 0, y, LEAKY_SLOPE * y)                  # LeakyReLU

    @pl.when(l % 2 == 0)
    def _():
        layer_step(h_a, h_b)

    @pl.when(l % 2 == 1)
    def _():
        layer_step(h_b, h_a)


def gcn_kron_forward(x, A, weights, *, tm=None):
    """Fused 5-layer GCN forward; returns (ah, ahw, z) exactly like GCN_Kron.forward."""
    N, f0 = x.shape
    L = len(weights)
    dims = [int(f0)] + [int(w.shape[1]) for w in weights]
    assert max(max(dims), max(int(w.shape[0]) for w in weights)) <= FPAD

    if tm is None:
        tm = min(512, _round_up(N, 128))   # 512-row A tiles at production size (N=3000 -> 3072)
    assert tm % 8 == 0
    Npad = _round_up(N, tm)
    n_row_tiles = Npad // tm

    # Pad: nodes -> Npad, features -> FPAD lanes.  A is binary, so bf16 storage is bit-exact.
    A_pad = jnp.zeros((Npad, Npad), jnp.bfloat16).at[:N, :N].set(A.astype(jnp.bfloat16))
    x_pad = jnp.zeros((Npad, FPAD), jnp.float32).at[:N, :f0].set(x.astype(jnp.float32))
    W_pad = jnp.zeros((L, FPAD, FPAD), jnp.float32)
    for li, w in enumerate(weights):
        W_pad = W_pad.at[li, : w.shape[0], : w.shape[1]].set(w.astype(jnp.float32))

    # VMEM budget (A may be double-buffered even with a constant index_map) + headroom,
    # capped at 64 MiB so the same plan is valid on v5e/v6e (128 MiB) and v7x (64 MiB/TC).
    vmem_need = (
        2 * Npad * Npad * 2        # resident bf16 adjacency
        + 2 * Npad * FPAD * 4      # resident padded features
        + 2 * FPAD * FPAD * 4      # per-layer weight block
        + 2 * Npad * FPAD * 4      # h ping-pong scratch
        + 2 * 3 * tm * FPAD * 4    # double-buffered output blocks
    )
    vmem_limit = int(min(max(vmem_need + (4 << 20), 32 << 20), 64 << 20))

    cost = pl.CostEstimate(
        flops=int(L * (2 * Npad * Npad * FPAD + 2 * Npad * FPAD * FPAD)),
        transcendentals=int(L * Npad * FPAD * 2),
        bytes_accessed=int(
            Npad * Npad * 2                  # A read once
            + Npad * FPAD * 4                # x
            + L * FPAD * FPAD * 4            # weights
            + (2 * L + 1) * Npad * FPAD * 4  # ah, ahw, z writes
        ),
    )

    kernel = functools.partial(_fused_gcn_kernel, tm=tm)

    ah_full, ahw_full, z_full = pl.pallas_call(
        kernel,
        out_shape=(
            jax.ShapeDtypeStruct((L, Npad, FPAD), jnp.float32),   # ah  = A @ h_{k-1}
            jax.ShapeDtypeStruct((L, Npad, FPAD), jnp.float32),   # ahw = (A @ h) @ W
            jax.ShapeDtypeStruct((Npad, FPAD), jnp.float32),      # z   = sigmoid(ahw_last)
        ),
        grid=(L, n_row_tiles),
        in_specs=[
            pl.BlockSpec((Npad, FPAD), lambda l, i: (0, 0)),        # x: resident
            pl.BlockSpec((Npad, Npad), lambda l, i: (0, 0)),        # A: resident, DMA'd once
            pl.BlockSpec((1, FPAD, FPAD), lambda l, i: (l, 0, 0)),  # W_l
        ],
        out_specs=(
            pl.BlockSpec((1, tm, FPAD), lambda l, i: (l, i, 0)),
            pl.BlockSpec((1, tm, FPAD), lambda l, i: (l, i, 0)),
            pl.BlockSpec((tm, FPAD), lambda l, i: (i, 0)),
        ),
        scratch_shapes=[
            pltpu.VMEM((Npad, FPAD), jnp.float32),  # h ping-pong slot a
            pltpu.VMEM((Npad, FPAD), jnp.float32),  # h ping-pong slot b
        ],
        compiler_params=pltpu.CompilerParams(
            dimension_semantics=("arbitrary", "arbitrary"),
            vmem_limit_bytes=vmem_limit,
        ),
        cost_estimate=cost,
    )(x_pad, A_pad, W_pad)

    ah = [ah_full[li, :N, : dims[li]] for li in range(L)]
    ahw = [ahw_full[li, :N, : dims[li + 1]] for li in range(L)]
    z = z_full[:N, : dims[L]]
    return ah, ahw, z


def gcn_kron_forward_ref(x, A, weights):
    """Pure-JAX reference for correctness checking."""
    acts = [
        lambda y: jnp.maximum(y, 0.0),
        lambda y: y * jax.nn.sigmoid(y),
        lambda y: jnp.where(y > 0, y, ELU_ALPHA * (jnp.exp(y) - 1.0)),
        lambda y: jnp.where(y > 0, y, LEAKY_SLOPE * y),
        lambda y: y,
    ]
    h = x
    ah, ahw = [], []
    for w, act in zip(weights, acts):
        t = A @ h
        p = t @ w
        ah.append(t)
        ahw.append(p)
        h = act(p)
    z = jax.nn.sigmoid(ahw[-1])
    return ah, ahw, z


def init_weights(key, dims):
    """PyTorch-Linear-like uniform init; weights stored as (in, out)."""
    ws = []
    for fin, fout in zip(dims[:-1], dims[1:]):
        key, sub = jax.random.split(key)
        bound = 1.0 / jnp.sqrt(float(fin))
        ws.append(jax.random.uniform(sub, (fin, fout), jnp.float32, -bound, bound))
    return ws


if __name__ == "__main__":
    key = jax.random.PRNGKey(0)

    # Small stand-in for the 3000-node graph.  N deliberately NOT a tile multiple so the
    # padding path needed for N=3000 is exercised.
    num_nodes = 200
    num_features = 10

    key, ka, kx, kw = jax.random.split(key, 4)
    rand = jax.random.uniform(ka, (num_nodes, num_nodes))
    upper = (rand < 0.02).astype(jnp.float32)
    A = jnp.clip(upper + upper.T, 0.0, 1.0)   # symmetric dense {0,1} adjacency

    # Original script uses zero features; random normals exercise the compute instead.
    x = jax.random.normal(kx, (num_nodes, num_features), jnp.float32)

    # layer dims: 10 -> 2 -> 3 -> 2 -> 3 -> 1
    dims = (num_features, 2, 3, 2, 3, 1)
    weights = init_weights(kw, dims)

    # tm=128 -> Npad=256, 2 row tiles: exercises the fused layer-grid, ping-pong and
    # padding/revisit paths at toy scale (production default is tm=512).
    ah, ahw, z = gcn_kron_forward(x, A, weights, tm=128)
    jax.block_until_ready(z)

    ah_ref, ahw_ref, z_ref = gcn_kron_forward_ref(x, A, weights)
    for got, want in zip(ah, ah_ref):
        assert got.shape == want.shape, "ah shape mismatch"
        assert jnp.allclose(got, want, atol=2e-4, rtol=2e-4), "ah mismatch"
    for got, want in zip(ahw, ahw_ref):
        assert got.shape == want.shape, "ahw shape mismatch"
        assert jnp.allclose(got, want, atol=2e-4, rtol=2e-4), "ahw mismatch"
    assert z.shape == z_ref.shape, "z shape mismatch"
    assert jnp.allclose(z, z_ref, atol=2e-4, rtol=2e-4), "z mismatch"

    print("KERNEL_OK")
</pallas_src>

<mosaic_0001>
module attributes {stable_mosaic.version = 11 : i64} {
  func.func @_fused_gcn_kernel(%arg0: i32, %arg1: i32, %arg2: memref<256x128xf32, #tpu.memory_space<vmem>>, %arg3: memref<256x256xbf16, #tpu.memory_space<vmem>>, %arg4: memref<1x128x128xf32, #tpu.memory_space<vmem>>, %arg5: memref<1x128x128xf32, #tpu.memory_space<vmem>>, %arg6: memref<1x128x128xf32, #tpu.memory_space<vmem>>, %arg7: memref<128x128xf32, #tpu.memory_space<vmem>>, %arg8: memref<256x128xf32, #tpu.memory_space<vmem>>, %arg9: memref<256x128xf32, #tpu.memory_space<vmem>>) attributes {dimension_semantics = [#tpu.dimension_semantics<arbitrary>, #tpu.dimension_semantics<arbitrary>], iteration_bounds = array<i64: 5, 2>, scalar_prefetch = 0 : i64, scratch_operands = 2 : i64, tpu.core_type = #tpu.core_type<tc>, window_params = [{pipeline_mode = #tpu.pipeline_mode<synchronous>, transform_indices = @transform_0, window_bounds = array<i64: 256, 128>}, {pipeline_mode = #tpu.pipeline_mode<synchronous>, transform_indices = @transform_1, window_bounds = array<i64: 256, 256>}, {transform_indices = @transform_2, window_bounds = array<i64: 1, 128, 128>}, {transform_indices = @transform_3, window_bounds = array<i64: 1, 128, 128>}, {transform_indices = @transform_4, window_bounds = array<i64: 1, 128, 128>}, {transform_indices = @transform_5, window_bounds = array<i64: 128, 128>}]} {
    %c0_i32 = arith.constant 0 : i32
    %0 = arith.cmpi eq, %arg0, %c0_i32 : i32
    %c0_i32_0 = arith.constant 0 : i32
    %1 = arith.cmpi eq, %arg1, %c0_i32_0 : i32
    %2 = arith.andi %0, %1 : i1
    %3 = arith.extui %2 : i1 to i32
    %c0_i32_1 = arith.constant 0 : i32
    %4 = arith.cmpi ne, %3, %c0_i32_1 : i32
    scf.if %4 {
      %c0 = arith.constant 0 : index
      %c0_16 = arith.constant 0 : index
      %33 = vector.load %arg2[%c0, %c0_16] : memref<256x128xf32, #tpu.memory_space<vmem>>, vector<256x128xf32>
      %c0_17 = arith.constant 0 : index
      %c0_18 = arith.constant 0 : index
      %34 = vector.load %arg8[%c0_17, %c0_18] : memref<256x128xf32, #tpu.memory_space<vmem>>, vector<256x128xf32>
      tpu.vector_store %arg8[%c0_17, %c0_18], %33 {strides = array<i32>} : memref<256x128xf32, #tpu.memory_space<vmem>>, vector<256x128xf32>,
    } else {
    }
    %c128_i32 = arith.constant 128 : i32
    %5 = arith.muli %arg1, %c128_i32 : i32
    %6 = tpu.assume_multiple %5, 128 : i32
    %c2_i32 = arith.constant 2 : i32
    %c0_i32_2 = arith.constant 0 : i32
    %7 = arith.cmpi eq, %c2_i32, %c0_i32_2 : i32
    %c1_i32 = arith.constant 1 : i32
    %8 = arith.select %7, %c1_i32, %c2_i32 : i32
    %9 = arith.remsi %arg0, %8 : i32
    %c0_i32_3 = arith.constant 0 : i32
    %10 = arith.cmpi ne, %9, %c0_i32_3 : i32
    %c0_i32_4 = arith.constant 0 : i32
    %11 = arith.cmpi slt, %9, %c0_i32_4 : i32
    %c0_i32_5 = arith.constant 0 : i32
    %12 = arith.cmpi slt, %8, %c0_i32_5 : i32
    %13 = arith.xori %11, %12 : i1
    %14 = arith.andi %13, %10 : i1
    %15 = arith.addi %9, %8 : i32
    %16 = arith.select %14, %15, %9 : i32
    %c0_i32_6 = arith.constant 0 : i32
    %17 = arith.cmpi eq, %16, %c0_i32_6 : i32
    %18 = arith.extui %17 : i1 to i32
    %c0_i32_7 = arith.constant 0 : i32
    %19 = arith.cmpi ne, %18, %c0_i32_7 : i32
    scf.if %19 {
      %33 = arith.index_cast %6 : i32 to index
      %c0 = arith.constant 0 : index
      %34 = vector.load %arg3[%33, %c0] : memref<256x256xbf16, #tpu.memory_space<vmem>>, vector<128x256xbf16>
      %35 = arith.extf %34 : vector<128x256xbf16> to vector<128x256xf32>
      %c0_16 = arith.constant 0 : index
      %c0_17 = arith.constant 0 : index
      %36 = vector.load %arg8[%c0_16, %c0_17] : memref<256x128xf32, #tpu.memory_space<vmem>>, vector<256x128xf32>
      %cst = arith.constant dense<0.000000e+00> : vector<128x128xf32>
      %37 = tpu.matmul %35, %36, %cst {dimension_numbers = #tpu.dot_dimension_numbers<[1], [0], [0], [1], [0, 0, 1, 1], [], []>} : vector<128x256xf32>, vector<256x128xf32>, vector<128x128xf32> -> vector<128x128xf32>
      %c0_18 = arith.constant 0 : index
      %c0_19 = arith.constant 0 : index
      %c0_20 = arith.constant 0 : index
      %38 = vector.load %arg4[%c0_18, %c0_19, %c0_20] : memref<1x128x128xf32, #tpu.memory_space<vmem>>, vector<1x128x128xf32>
      %39 = vector.shape_cast %38 : vector<1x128x128xf32> to vector<128x128xf32>
      %cst_21 = arith.constant dense<0.000000e+00> : vector<128x128xf32>
      %40 = tpu.matmul %37, %39, %cst_21 {dimension_numbers = #tpu.dot_dimension_numbers<[1], [0], [0], [1], [0, 0, 1, 1], [], []>} : vector<128x128xf32>, vector<128x128xf32>, vector<128x128xf32> -> vector<128x128xf32>
      %c0_22 = arith.constant 0 : index
      %c0_23 = arith.constant 0 : index
      %c0_24 = arith.constant 0 : index
      %41 = vector.load %arg5[%c0_22, %c0_23, %c0_24] : memref<1x128x128xf32, #tpu.memory_space<vmem>>, vector<1x128x128xf32>
      %42 = vector.shape_cast %41 : vector<1x128x128xf32> to vector<128x128xf32>
      %43 = vector.shape_cast %37 : vector<128x128xf32> to vector<1x128x128xf32>
      tpu.vector_store %arg5[%c0_22, %c0_23, %c0_24], %43 {strides = array<i32>} : memref<1x128x128xf32, #tpu.memory_space<vmem>>, vector<1x128x128xf32>,
      %c0_25 = arith.constant 0 : index
      %c0_26 = arith.constant 0 : index
      %c0_27 = arith.constant 0 : index
      %44 = vector.load %arg6[%c0_25, %c0_26, %c0_27] : memref<1x128x128xf32, #tpu.memory_space<vmem>>, vector<1x128x128xf32>
      %45 = vector.shape_cast %44 : vector<1x128x128xf32> to vector<128x128xf32>
      %46 = vector.shape_cast %40 : vector<128x128xf32> to vector<1x128x128xf32>
      tpu.vector_store %arg6[%c0_25, %c0_26, %c0_27], %46 {strides = array<i32>} : memref<1x128x128xf32, #tpu.memory_space<vmem>>, vector<1x128x128xf32>,
      %47 = arith.negf %40 : vector<128x128xf32>
      %48 = math.exp %47 : vector<128x128xf32>
      %cst_28 = arith.constant 1.000000e+00 : f32
      %49 = vector.broadcast %cst_28 : f32 to vector<128x128xf32>
      %50 = arith.addf %49, %48 : vector<128x128xf32>
      %51 = arith.divf %49, %50 : vector<128x128xf32>
      %c0_29 = arith.constant 0 : index
      %c0_30 = arith.constant 0 : index
      %52 = vector.load %arg7[%c0_29, %c0_30] : memref<128x128xf32, #tpu.memory_space<vmem>>, vector<128x128xf32>
      tpu.vector_store %arg7[%c0_29, %c0_30], %51 {strides = array<i32>} : memref<128x128xf32, #tpu.memory_space<vmem>>, vector<128x128xf32>,
      %c0_i32_31 = arith.constant 0 : i32
      %53 = arith.cmpi eq, %arg0, %c0_i32_31 : i32
      %54 = arith.extui %53 : i1 to i32
      %c0_i32_32 = arith.constant 0 : i32
      %55 = arith.cmpi ne, %54, %c0_i32_32 : i32
      scf.if %55 {
        %cst_38 = arith.constant 0.000000e+00 : f32
        %65 = vector.broadcast %cst_38 : f32 to vector<128x128xf32>
        %66 = arith.maximumf %40, %65 : vector<128x128xf32>
        %67 = arith.index_cast %6 : i32 to index
        %c0_39 = arith.constant 0 : index
        %68 = vector.load %arg9[%67, %c0_39] : memref<256x128xf32, #tpu.memory_space<vmem>>, vector<128x128xf32>
        tpu.vector_store %arg9[%67, %c0_39], %66 {strides = array<i32>} : memref<256x128xf32, #tpu.memory_space<vmem>>, vector<128x128xf32>,
      } else {
      }
      %c1_i32_33 = arith.constant 1 : i32
      %56 = arith.cmpi eq, %arg0, %c1_i32_33 : i32
      %57 = arith.extui %56 : i1 to i32
      %c0_i32_34 = arith.constant 0 : i32
      %58 = arith.cmpi ne, %57, %c0_i32_34 : i32
      scf.if %58 {
        %65 = arith.negf %40 : vector<128x128xf32>
        %66 = math.exp %65 : vector<128x128xf32>
        %cst_38 = arith.constant 1.000000e+00 : f32
        %67 = vector.broadcast %cst_38 : f32 to vector<128x128xf32>
        %68 = arith.addf %67, %66 : vector<128x128xf32>
        %69 = arith.divf %67, %68 : vector<128x128xf32>
        %70 = arith.mulf %40, %69 : vector<128x128xf32>
        %71 = arith.index_cast %6 : i32 to index
        %c0_39 = arith.constant 0 : index
        %72 = vector.load %arg9[%71, %c0_39] : memref<256x128xf32, #tpu.memory_space<vmem>>, vector<128x128xf32>
        tpu.vector_store %arg9[%71, %c0_39], %70 {strides = array<i32>} : memref<256x128xf32, #tpu.memory_space<vmem>>, vector<128x128xf32>,
      } else {
      }
      %c2_i32_35 = arith.constant 2 : i32
      %59 = arith.cmpi eq, %arg0, %c2_i32_35 : i32
      %60 = arith.extui %59 : i1 to i32
      %c0_i32_36 = arith.constant 0 : i32
      %61 = arith.cmpi ne, %60, %c0_i32_36 : i32
      scf.if %61 {
        %cst_38 = arith.constant 0.000000e+00 : f32
        %65 = vector.broadcast %cst_38 : f32 to vector<128x128xf32>
        %66 = arith.cmpf ogt, %40, %65 : vector<128x128xf32>
        %67 = math.exp %40 : vector<128x128xf32>
        %cst_39 = arith.constant 1.000000e+00 : f32
        %68 = vector.broadcast %cst_39 : f32 to vector<128x128xf32>
        %69 = arith.subf %67, %68 : vector<128x128xf32>
        %cst_40 = arith.constant 1.000000e+00 : f32
        %70 = vector.broadcast %cst_40 : f32 to vector<128x128xf32>
        %71 = arith.mulf %70, %69 : vector<128x128xf32>
        %72 = arith.select %66, %40, %71 : vector<128x128xi1>, vector<128x128xf32>
        %73 = arith.index_cast %6 : i32 to index
        %c0_41 = arith.constant 0 : index
        %74 = vector.load %arg9[%73, %c0_41] : memref<256x128xf32, #tpu.memory_space<vmem>>, vector<128x128xf32>
        tpu.vector_store %arg9[%73, %c0_41], %72 {strides = array<i32>} : memref<256x128xf32, #tpu.memory_space<vmem>>, vector<128x128xf32>,
      } else {
      }
      %c3_i32 = arith.constant 3 : i32
      %62 = arith.cmpi eq, %arg0, %c3_i32 : i32
      %63 = arith.extui %62 : i1 to i32
      %c0_i32_37 = arith.constant 0 : i32
      %64 = arith.cmpi ne, %63, %c0_i32_37 : i32
      scf.if %64 {
        %cst_38 = arith.constant 0.000000e+00 : f32
        %65 = vector.broadcast %cst_38 : f32 to vector<128x128xf32>
        %66 = arith.cmpf ogt, %40, %65 : vector<128x128xf32>
        %cst_39 = arith.constant 0.00999999977 : f32
        %67 = vector.broadcast %cst_39 : f32 to vector<128x128xf32>
        %68 = arith.mulf %67, %40 : vector<128x128xf32>
        %69 = arith.select %66, %40, %68 : vector<128x128xi1>, vector<128x128xf32>
        %70 = arith.index_cast %6 : i32 to index
        %c0_40 = arith.constant 0 : index
        %71 = vector.load %arg9[%70, %c0_40] : memref<256x128xf32, #tpu.memory_space<vmem>>, vector<128x128xf32>
        tpu.vector_store %arg9[%70, %c0_40], %69 {strides = array<i32>} : memref<256x128xf32, #tpu.memory_space<vmem>>, vector<128x128xf32>,
      } else {
      }
    } else {
    }
    %c2_i32_8 = arith.constant 2 : i32
    %c0_i32_9 = arith.constant 0 : i32
    %20 = arith.cmpi eq, %c2_i32_8, %c0_i32_9 : i32
    %c1_i32_10 = arith.constant 1 : i32
    %21 = arith.select %20, %c1_i32_10, %c2_i32_8 : i32
    %22 = arith.remsi %arg0, %21 : i32
    %c0_i32_11 = arith.constant 0 : i32
    %23 = arith.cmpi ne, %22, %c0_i32_11 : i32
    %c0_i32_12 = arith.constant 0 : i32
    %24 = arith.cmpi slt, %22, %c0_i32_12 : i32
    %c0_i32_13 = arith.constant 0 : i32
    %25 = arith.cmpi slt, %21, %c0_i32_13 : i32
    %26 = arith.xori %24, %25 : i1
    %27 = arith.andi %26, %23 : i1
    %28 = arith.addi %22, %21 : i32
    %29 = arith.select %27, %28, %22 : i32
    %c1_i32_14 = arith.constant 1 : i32
    %30 = arith.cmpi eq, %29, %c1_i32_14 : i32
    %31 = arith.extui %30 : i1 to i32
    %c0_i32_15 = arith.constant 0 : i32
    %32 = arith.cmpi ne, %31, %c0_i32_15 : i32
    scf.if %32 {
      %33 = arith.index_cast %6 : i32 to index
      %c0 = arith.constant 0 : index
      %34 = vector.load %arg3[%33, %c0] : memref<256x256xbf16, #tpu.memory_space<vmem>>, vector<128x256xbf16>
      %35 = arith.extf %34 : vector<128x256xbf16> to vector<128x256xf32>
      %c0_16 = arith.constant 0 : index
      %c0_17 = arith.constant 0 : index
      %36 = vector.load %arg9[%c0_16, %c0_17] : memref<256x128xf32, #tpu.memory_space<vmem>>, vector<256x128xf32>
      %cst = arith.constant dense<0.000000e+00> : vector<128x128xf32>
      %37 = tpu.matmul %35, %36, %cst {dimension_numbers = #tpu.dot_dimension_numbers<[1], [0], [0], [1], [0, 0, 1, 1], [], []>} : vector<128x256xf32>, vector<256x128xf32>, vector<128x128xf32> -> vector<128x128xf32>
      %c0_18 = arith.constant 0 : index
      %c0_19 = arith.constant 0 : index
      %c0_20 = arith.constant 0 : index
      %38 = vector.load %arg4[%c0_18, %c0_19, %c0_20] : memref<1x128x128xf32, #tpu.memory_space<vmem>>, vector<1x128x128xf32>
      %39 = vector.shape_cast %38 : vector<1x128x128xf32> to vector<128x128xf32>
      %cst_21 = arith.constant dense<0.000000e+00> : vector<128x128xf32>
      %40 = tpu.matmul %37, %39, %cst_21 {dimension_numbers = #tpu.dot_dimension_numbers<[1], [0], [0], [1], [0, 0, 1, 1], [], []>} : vector<128x128xf32>, vector<128x128xf32>, vector<128x128xf32> -> vector<128x128xf32>
      %c0_22 = arith.constant 0 : index
      %c0_23 = arith.constant 0 : index
      %c0_24 = arith.constant 0 : index
      %41 = vector.load %arg5[%c0_22, %c0_23, %c0_24] : memref<1x128x128xf32, #tpu.memory_space<vmem>>, vector<1x128x128xf32>
      %42 = vector.shape_cast %41 : vector<1x128x128xf32> to vector<128x128xf32>
      %43 = vector.shape_cast %37 : vector<128x128xf32> to vector<1x128x128xf32>
      tpu.vector_store %arg5[%c0_22, %c0_23, %c0_24], %43 {strides = array<i32>} : memref<1x128x128xf32, #tpu.memory_space<vmem>>, vector<1x128x128xf32>,
      %c0_25 = arith.constant 0 : index
      %c0_26 = arith.constant 0 : index
      %c0_27 = arith.constant 0 : index
      %44 = vector.load %arg6[%c0_25, %c0_26, %c0_27] : memref<1x128x128xf32, #tpu.memory_space<vmem>>, vector<1x128x128xf32>
      %45 = vector.shape_cast %44 : vector<1x128x128xf32> to vector<128x128xf32>
      %46 = vector.shape_cast %40 : vector<128x128xf32> to vector<1x128x128xf32>
      tpu.vector_store %arg6[%c0_25, %c0_26, %c0_27], %46 {strides = array<i32>} : memref<1x128x128xf32, #tpu.memory_space<vmem>>, vector<1x128x128xf32>,
      %47 = arith.negf %40 : vector<128x128xf32>
      %48 = math.exp %47 : vector<128x128xf32>
      %cst_28 = arith.constant 1.000000e+00 : f32
      %49 = vector.broadcast %cst_28 : f32 to vector<128x128xf32>
      %50 = arith.addf %49, %48 : vector<128x128xf32>
      %51 = arith.divf %49, %50 : vector<128x128xf32>
      %c0_29 = arith.constant 0 : index
      %c0_30 = arith.constant 0 : index
      %52 = vector.load %arg7[%c0_29, %c0_30] : memref<128x128xf32, #tpu.memory_space<vmem>>, vector<128x128xf32>
      tpu.vector_store %arg7[%c0_29, %c0_30], %51 {strides = array<i32>} : memref<128x128xf32, #tpu.memory_space<vmem>>, vector<128x128xf32>,
      %c0_i32_31 = arith.constant 0 : i32
      %53 = arith.cmpi eq, %arg0, %c0_i32_31 : i32
      %54 = arith.extui %53 : i1 to i32
      %c0_i32_32 = arith.constant 0 : i32
      %55 = arith.cmpi ne, %54, %c0_i32_32 : i32
      scf.if %55 {
        %cst_38 = arith.constant 0.000000e+00 : f32
        %65 = vector.broadcast %cst_38 : f32 to vector<128x128xf32>
        %66 = arith.maximumf %40, %65 : vector<128x128xf32>
        %67 = arith.index_cast %6 : i32 to index
        %c0_39 = arith.constant 0 : index
        %68 = vector.load %arg8[%67, %c0_39] : memref<256x128xf32, #tpu.memory_space<vmem>>, vector<128x128xf32>
        tpu.vector_store %arg8[%67, %c0_39], %66 {strides = array<i32>} : memref<256x128xf32, #tpu.memory_space<vmem>>, vector<128x128xf32>,
      } else {
      }
      %c1_i32_33 = arith.constant 1 : i32
      %56 = arith.cmpi eq, %arg0, %c1_i32_33 : i32
      %57 = arith.extui %56 : i1 to i32
      %c0_i32_34 = arith.constant 0 : i32
      %58 = arith.cmpi ne, %57, %c0_i32_34 : i32
      scf.if %58 {
        %65 = arith.negf %40 : vector<128x128xf32>
        %66 = math.exp %65 : vector<128x128xf32>
        %cst_38 = arith.constant 1.000000e+00 : f32
        %67 = vector.broadcast %cst_38 : f32 to vector<128x128xf32>
        %68 = arith.addf %67, %66 : vector<128x128xf32>
        %69 = arith.divf %67, %68 : vector<128x128xf32>
        %70 = arith.mulf %40, %69 : vector<128x128xf32>
        %71 = arith.index_cast %6 : i32 to index
        %c0_39 = arith.constant 0 : index
        %72 = vector.load %arg8[%71, %c0_39] : memref<256x128xf32, #tpu.memory_space<vmem>>, vector<128x128xf32>
        tpu.vector_store %arg8[%71, %c0_39], %70 {strides = array<i32>} : memref<256x128xf32, #tpu.memory_space<vmem>>, vector<128x128xf32>,
      } else {
      }
      %c2_i32_35 = arith.constant 2 : i32
      %59 = arith.cmpi eq, %arg0, %c2_i32_35 : i32
      %60 = arith.extui %59 : i1 to i32
      %c0_i32_36 = arith.constant 0 : i32
      %61 = arith.cmpi ne, %60, %c0_i32_36 : i32
      scf.if %61 {
        %cst_38 = arith.constant 0.000000e+00 : f32
        %65 = vector.broadcast %cst_38 : f32 to vector<128x128xf32>
        %66 = arith.cmpf ogt, %40, %65 : vector<128x128xf32>
        %67 = math.exp %40 : vector<128x128xf32>
        %cst_39 = arith.constant 1.000000e+00 : f32
        %68 = vector.broadcast %cst_39 : f32 to vector<128x128xf32>
        %69 = arith.subf %67, %68 : vector<128x128xf32>
        %cst_40 = arith.constant 1.000000e+00 : f32
        %70 = vector.broadcast %cst_40 : f32 to vector<128x128xf32>
        %71 = arith.mulf %70, %69 : vector<128x128xf32>
        %72 = arith.select %66, %40, %71 : vector<128x128xi1>, vector<128x128xf32>
        %73 = arith.index_cast %6 : i32 to index
        %c0_41 = arith.constant 0 : index
        %74 = vector.load %arg8[%73, %c0_41] : memref<256x128xf32, #tpu.memory_space<vmem>>, vector<128x128xf32>
        tpu.vector_store %arg8[%73, %c0_41], %72 {strides = array<i32>} : memref<256x128xf32, #tpu.memory_space<vmem>>, vector<128x128xf32>,
      } else {
      }
      %c3_i32 = arith.constant 3 : i32
      %62 = arith.cmpi eq, %arg0, %c3_i32 : i32
      %63 = arith.extui %62 : i1 to i32
      %c0_i32_37 = arith.constant 0 : i32
      %64 = arith.cmpi ne, %63, %c0_i32_37 : i32
      scf.if %64 {
        %cst_38 = arith.constant 0.000000e+00 : f32
        %65 = vector.broadcast %cst_38 : f32 to vector<128x128xf32>
        %66 = arith.cmpf ogt, %40, %65 : vector<128x128xf32>
        %cst_39 = arith.constant 0.00999999977 : f32
        %67 = vector.broadcast %cst_39 : f32 to vector<128x128xf32>
        %68 = arith.mulf %67, %40 : vector<128x128xf32>
        %69 = arith.select %66, %40, %68 : vector<128x128xi1>, vector<128x128xf32>
        %70 = arith.index_cast %6 : i32 to index
        %c0_40 = arith.constant 0 : index
        %71 = vector.load %arg8[%70, %c0_40] : memref<256x128xf32, #tpu.memory_space<vmem>>, vector<128x128xf32>
        tpu.vector_store %arg8[%70, %c0_40], %69 {strides = array<i32>} : memref<256x128xf32, #tpu.memory_space<vmem>>, vector<128x128xf32>,
      } else {
      }
    } else {
    }
    return
  }
  func.func @transform_0(%arg0: i32, %arg1: i32) -> (i32, i32) {
    %c0_i32 = arith.constant 0 : i32
    %c0_i32_0 = arith.constant 0 : i32
    %c0_i32_1 = arith.constant 0 : i32
    return %c0_i32, %c0_i32_0 : i32, i32
  }
  func.func @transform_1(%arg0: i32, %arg1: i32) -> (i32, i32) {
    %c0_i32 = arith.constant 0 : i32
    %c0_i32_0 = arith.constant 0 : i32
    %c0_i32_1 = arith.constant 0 : i32
    return %c0_i32, %c0_i32_0 : i32, i32
  }
  func.func @transform_2(%arg0: i32, %arg1: i32) -> (i32, i32, i32) {
    %c0_i32 = arith.constant 0 : i32
    %c0_i32_0 = arith.constant 0 : i32
    %c0_i32_1 = arith.constant 0 : i32
    return %arg0, %c0_i32, %c0_i32_0 : i32, i32, i32
  }
  func.func @transform_3(%arg0: i32, %arg1: i32) -> (i32, i32, i32) {
    %c0_i32 = arith.constant 0 : i32
    %c0_i32_0 = arith.constant 0 : i32
    return %arg0, %arg1, %c0_i32 : i32, i32, i32
  }
  func.func @transform_4(%arg0: i32, %arg1: i32) -> (i32, i32, i32) {
    %c0_i32 = arith.constant 0 : i32
    %c0_i32_0 = arith.constant 0 : i32
    return %arg0, %arg1, %c0_i32 : i32, i32, i32
  }
  func.func @transform_5(%arg0: i32, %arg1: i32) -> (i32, i32) {
    %c0_i32 = arith.constant 0 : i32
    %c0_i32_0 = arith.constant 0 : i32
    return %arg1, %c0_i32 : i32, i32
  }
}

</mosaic_0001>

<llo_original>
// kernel: tpu_custom_call.1
$region0: #{tpu_custom_call.1}
  #allocation0 [shape = 'u32[]', space=smem, size = 0x4, offset = 0x4, fixed_abs, tag = 'smem constant byte address 0x4 - core index']
  #allocation1 [shape = 'u32[72,128]{1,0:T(1,128)}', space=vmem, size = 0x9000, scoped, tag = 'internal scratch']
  #allocation2 [shape = 'f32[256,128]{1,0:T(8,128)}', space=vmem, size = 0x20000, scoped, tag = 'scratch operand']
  #allocation3 [shape = 'f32[256,128]{1,0:T(8,128)}', space=vmem, size = 0x20000, scoped, tag = 'scratch operand']
  %s0 = inlined_call_operand.hbm [shape: f32[256,128], index: 0, kind: input, shape index: {}]
  %s1 = inlined_call_operand.hbm [shape: bf16[256,256], index: 1, kind: input, shape index: {}]
  %s2 = inlined_call_operand.hbm [shape: f32[5,128,128], index: 2, kind: input, shape index: {}]
  %s3 = inlined_call_operand.hbm [shape: f32[5,256,128], index: 3, kind: output, shape index: {0}]
  %s4 = inlined_call_operand.hbm [shape: f32[5,256,128], index: 4, kind: output, shape index: {1}]
  %s5 = inlined_call_operand.hbm [shape: f32[256,128], index: 5, kind: output, shape index: {2}]
  %6 = xla_tuple %s3, %s4, %s5
  %s7 = sld [smem:[#allocation0]]
  $region117: #{tpu_custom_call.1} parent=0
    _
  %s9 = ssub.s32 1, %s7
  %s10 = scalar_select 0, %s9, %s7
  $region1: #{tpu_custom_call.1} parent=0
    #allocation4 [shape = 'u8[131072]{0}', space=vmem, size = 0x20000, scoped, tag = 'input window, operand 0, single buffered']
    #allocation5 [shape = 's32[2]{0}', space=sflag, size = 0x8, scoped, tag = 'scoped memory for tpu_custom_call.1']
    #allocation6 [shape = 's32[2]{0}', space=sflag, size = 0x8, scoped, tag = 'scoped memory for tpu_custom_call.1']
    #allocation7 [shape = 'u8[131072]{0}', space=vmem, size = 0x20000, scoped, tag = 'input window, operand 1, single buffered']
    #allocation8 [shape = 's32[1]{0}', space=sflag, size = 0x4, scoped, tag = 'scoped memory for tpu_custom_call.1']
    #allocation9 [shape = 'u8[131072]{0}', space=vmem, size = 0x20000, scoped, tag = 'input window, operand 2']
    #allocation10 [shape = 'u8[131072]{0}', space=vmem, size = 0x20000, scoped, tag = 'output window, operand 0']
    #allocation11 [shape = 'u8[131072]{0}', space=vmem, size = 0x20000, scoped, tag = 'output window, operand 1']
    #allocation12 [shape = 's32[2]{0}', space=sflag, size = 0x8, scoped, tag = 'scoped memory for tpu_custom_call.1']
    #allocation13 [shape = 'u8[131072]{0}', space=vmem, size = 0x20000, scoped, tag = 'output window, operand 2']
    %11 = vsyncpa [#allocation5], 0
    %12 = vsyncpa [#allocation8], 0
    %13 = vsyncpa [#allocation6], 0
    %s14 = scalar_lea.sflag [#allocation6], 1
    %15 = vsyncpa %s14, 0
    %16 = vsyncpa [#allocation12], 0
    %s17 = scalar_lea.sflag [#allocation12], 1
    %18 = vsyncpa %s17, 0
    loop: start=0, step=1, limit=12
    $region2: #{tpu_custom_call.1} parent=1 // loop_pre_header
      _
    $region3: #{tpu_custom_call.1} parent=1 // loop_header
      %s20 = sphi 0, %s24
      %p21 = scmp.ge.s32.totalorder %s20, 12
      %s27 = sphi 0, %s39
      %s28 = sphi 0, %s35
      %s29 = sphi 0, %s27
      %s30 = sphi 0, %s28
      %s31 = sphi 0, %s29
      %s32 = sphi 0, %s30
      %s40 = sphi 0, %s40
      %s42 = sphi 0, %s40
      %s43 = sphi 0, %s42
      %s57 = sphi 0, %s43
      %s61 = sphi 0, %s61
      %s63 = sphi 0, %s61
      %s64 = sphi 0, %s63
      %s78 = sphi 0, %s64
      %s84 = sphi 0, %s86
      %s87 = sphi 0, %s84
      %s88 = sphi 0, %s87
      %s104 = sphi 0, %s88
      %s112 = sphi 0, %s114
      %s115 = sphi 0, %s112
      %s116 = sphi 0, %s115
      %s132 = sphi 0, %s116
      %s140 = sphi 0, %s142
      %s143 = sphi 0, %s140
      %s144 = sphi 0, %s143
      %s160 = sphi 0, %s144
      %s166 = sphi 0, %s168
      %s169 = sphi 0, %s166
      %s170 = sphi 0, %s169
      %s186 = sphi 0, %s170
    $region4: #{tpu_custom_call.1} parent=1 // loop_header_branch
      %23 = sbr.rel (%p21) target = $region8
    $region5: #{tpu_custom_call.1} parent=1 // loop_body
      %s25 = ssub.s32 %s20, 1
      %s26 = ssub.s32 %s20, 2
      %s33 = sadd.s32 1, %s28
      %p34 = scmp.ge.s32.totalorder %s33, 2
      %s35 = scalar_select %p34, 0, %s33
      %s36 = sadd.s32 1, %s27
      %s37 = scalar_select %p34, %s36, %s27
      %p38 = scmp.ge.s32.totalorder %s37, 5
      %s39 = scalar_select %p38, 0, %s37
      %s41 = sadd.s32 %s40, 1
      %p44 = scmp.eq.s32.totalorder %s20, 9
      %p45 = scmp.ne.s32.totalorder %s40, %s42
      %p46 = scmp.eq.s32.totalorder %s20, 0
      %p47 = por %p45, %p46
      %p48 = scmp.ne.s32.totalorder %s40, %s42
      %p49 = scmp.eq.s32.totalorder %s25, 9
      %p50 = por %p48, %p49
      %p51 = scmp.ne.s32.totalorder %s42, %s43
      %p52 = scmp.eq.s32.totalorder %s25, 0
      %p53 = por %p51, %p52
      %p54 = scmp.ne.s32.totalorder %s42, %s43
      %p55 = scmp.eq.s32.totalorder %s26, 9
      %p56 = por %p54, %p55
      %p58 = scmp.ne.s32.totalorder %s43, %s57
      %p59 = scmp.eq.s32.totalorder %s26, 0
      %p60 = por %p58, %p59
      %s62 = sadd.s32 %s61, 1
      %p65 = scmp.eq.s32.totalorder %s20, 9
      %p66 = scmp.ne.s32.totalorder %s61, %s63
      %p67 = scmp.eq.s32.totalorder %s20, 0
      %p68 = por %p66, %p67
      %p69 = scmp.ne.s32.totalorder %s61, %s63
      %p70 = scmp.eq.s32.totalorder %s25, 9
      %p71 = por %p69, %p70
      %p72 = scmp.ne.s32.totalorder %s63, %s64
      %p73 = scmp.eq.s32.totalorder %s25, 0
      %p74 = por %p72, %p73
      %p75 = scmp.ne.s32.totalorder %s63, %s64
      %p76 = scmp.eq.s32.totalorder %s26, 9
      %p77 = por %p75, %p76
      %p79 = scmp.ne.s32.totalorder %s64, %s78
      %p80 = scmp.eq.s32.totalorder %s26, 0
      %p81 = por %p79, %p80
      %s82 = ssub.s32 %s27, %s39
      %p83 = scmp.eq.s32.totalorder %s82, 0
      %s85 = sadd.s32 %s84, 1
      %s86 = scalar_select %p83, %s84, %s85
      %p89 = pneg %p83
      %p90 = scmp.eq.s32.totalorder %s20, 9
      %p91 = por %p89, %p90
      %p92 = scmp.ne.s32.totalorder %s84, %s87
      %p93 = scmp.eq.s32.totalorder %s20, 0
      %p94 = por %p92, %p93
      %p95 = scmp.ne.s32.totalorder %s84, %s87
      %p96 = scmp.eq.s32.totalorder %s25, 9
      %p97 = por %p95, %p96
      %p98 = scmp.ne.s32.totalorder %s87, %s88
      %p99 = scmp.eq.s32.totalorder %s25, 0
      %p100 = por %p98, %p99
      %p101 = scmp.ne.s32.totalorder %s87, %s88
      %p102 = scmp.eq.s32.totalorder %s26, 9
      %p103 = por %p101, %p102
      %p105 = scmp.ne.s32.totalorder %s88, %s104
      %p106 = scmp.eq.s32.totalorder %s26, 0
      %p107 = por %p105, %p106
      %s108 = ssub.s32 %s27, %s39
      %s109 = ssub.s32 %s28, %s35
      %s110 = sor.u32 %s108, %s109
      %p111 = scmp.eq.s32.totalorder %s110, 0
      %s113 = sadd.s32 %s112, 1
      %s114 = scalar_select %p111, %s112, %s113
      %p117 = pneg %p111
      %p118 = scmp.eq.s32.totalorder %s20, 9
      %p119 = por %p117, %p118
      %p120 = scmp.ne.s32.totalorder %s112, %s115
      %p121 = scmp.eq.s32.totalorder %s20, 0
      %p122 = por %p120, %p121
      %p123 = scmp.ne.s32.totalorder %s112, %s115
      %p124 = scmp.eq.s32.totalorder %s25, 9
      %p125 = por %p123, %p124
      %p126 = scmp.ne.s32.totalorder %s115, %s116
      %p127 = scmp.eq.s32.totalorder %s25, 0
      %p128 = por %p126, %p127
      %p129 = scmp.ne.s32.totalorder %s115, %s116
      %p130 = scmp.eq.s32.totalorder %s26, 9
      %p131 = por %p129, %p130
      %p133 = scmp.ne.s32.totalorder %s116, %s132
      %p134 = scmp.eq.s32.totalorder %s26, 0
      %p135 = por %p133, %p134
      %s136 = ssub.s32 %s27, %s39
      %s137 = ssub.s32 %s28, %s35
      %s138 = sor.u32 %s136, %s137
      %p139 = scmp.eq.s32.totalorder %s138, 0
      %s141 = sadd.s32 %s140, 1
      %s142 = scalar_select %p139, %s140, %s141
      %p145 = pneg %p139
      %p146 = scmp.eq.s32.totalorder %s20, 9
      %p147 = por %p145, %p146
      %p148 = scmp.ne.s32.totalorder %s140, %s143
      %p149 = scmp.eq.s32.totalorder %s20, 0
      %p150 = por %p148, %p149
      %p151 = scmp.ne.s32.totalorder %s140, %s143
      %p152 = scmp.eq.s32.totalorder %s25, 9
      %p153 = por %p151, %p152
      %p154 = scmp.ne.s32.totalorder %s143, %s144
      %p155 = scmp.eq.s32.totalorder %s25, 0
      %p156 = por %p154, %p155
      %p157 = scmp.ne.s32.totalorder %s143, %s144
      %p158 = scmp.eq.s32.totalorder %s26, 9
      %p159 = por %p157, %p158
      %p161 = scmp.ne.s32.totalorder %s144, %s160
      %p162 = scmp.eq.s32.totalorder %s26, 0
      %p163 = por %p161, %p162
      %s164 = ssub.s32 %s28, %s35
      %p165 = scmp.eq.s32.totalorder %s164, 0
      %s167 = sadd.s32 %s166, 1
      %s168 = scalar_select %p165, %s166, %s167
      %p171 = pneg %p165
      %p172 = scmp.eq.s32.totalorder %s20, 9
      %p173 = por %p171, %p172
      %p174 = scmp.ne.s32.totalorder %s166, %s169
      %p175 = scmp.eq.s32.totalorder %s20, 0
      %p176 = por %p174, %p175
      %p177 = scmp.ne.s32.totalorder %s166, %s169
      %p178 = scmp.eq.s32.totalorder %s25, 9
      %p179 = por %p177, %p178
      %p180 = scmp.ne.s32.totalorder %s169, %s170
      %p181 = scmp.eq.s32.totalorder %s25, 0
      %p182 = por %p180, %p181
      %p183 = scmp.ne.s32.totalorder %s169, %s170
      %p184 = scmp.eq.s32.totalorder %s26, 9
      %p185 = por %p183, %p184
      %p187 = scmp.ne.s32.totalorder %s170, %s186
      %p188 = scmp.eq.s32.totalorder %s26, 0
      %p189 = por %p187, %p188
      %p190 = scmp.le.s32.totalorder 1, %s20
      %p191 = scmp.lt.s32.totalorder %s20, 11
      %p192 = pnand %p190, %p191
      %p193 = pneg %p192
      // Predicated region
      $region9: #{tpu_custom_call.1} parent=5 // pred_check
        _
      $region10: #{tpu_custom_call.1} parent=5 // pred_check_branch
        %195 = sbr.rel (%p192) target = $region12
      $region11: #{tpu_custom_call.1} parent=5 // pred_region
        %s196 = ssub.s32 %s20, 1
        // Predicated region
        $region13: #{tpu_custom_call.1} parent=11 // pred_check
          %p197 = pneg %p53
        $region14: #{tpu_custom_call.1} parent=11 // pred_check_branch
          %199 = sbr.rel (%p197) target = $region16
        $region15: #{tpu_custom_call.1} parent=11 // pred_region
          %201 = vsyncadd [#allocation5], 0
          %s202 = sshll.u32 %s0, 4
          %s203 = int_to_ptr.hbm [resolvable:$true] %s202
          %s204 = sshll.u32 [#allocation4], 4
          %s205 = int_to_ptr.vmem [resolvable:$true] %s204
          %210 = dma.hbm_to_vmem [thread:$0]  %s203, 4096, %s205, [#allocation5], 128, 128, 8
        $region16: #{tpu_custom_call.1} parent=11 // pred_fallthru
          _
        // Predicated region
        $region17: #{tpu_custom_call.1} parent=11 // pred_check
          %p211 = pneg %p74
        $region18: #{tpu_custom_call.1} parent=11 // pred_check_branch
          %213 = sbr.rel (%p211) target = $region20
        $region19: #{tpu_custom_call.1} parent=11 // pred_region
          %215 = vsyncadd [#allocation8], 0
          %s216 = sshll.u32 %s1, 4
          %s217 = int_to_ptr.hbm [resolvable:$true] %s216
          %s218 = sshll.u32 [#allocation7], 4
          %s219 = int_to_ptr.vmem [resolvable:$true] %s218
          %224 = dma.hbm_to_vmem [thread:$0]  %s217, 4096, %s219, [#allocation8], 128, 128, 8
        $region20: #{tpu_custom_call.1} parent=11 // pred_fallthru
          _
      $region12: #{tpu_custom_call.1} parent=5 // pred_fallthru
        _
      %p225 = scmp.lt.s32.totalorder %s20, 10
      // Predicated region
      $region21: #{tpu_custom_call.1} parent=5 // pred_check
        %p226 = pneg %p225
      $region22: #{tpu_custom_call.1} parent=5 // pred_check_branch
        %228 = sbr.rel (%p226) target = $region24
      $region23: #{tpu_custom_call.1} parent=5 // pred_region
        // Predicated region
        $region25: #{tpu_custom_call.1} parent=23 // pred_check
          %p229 = pneg %p94
        $region26: #{tpu_custom_call.1} parent=23 // pred_check_branch
          %231 = sbr.rel (%p229) target = $region28
        $region27: #{tpu_custom_call.1} parent=23 // pred_region
          %s232 = sand.u32 %s20, 1
          %s233 = scalar_lea.sflag [#allocation5], %s232
          %s234 = sand.u32 %s84, 1
          %s235 = smul.addr %s234, 128
          %s236 = scalar_lea.vmem [#allocation9], %s235
          %238 = vsyncadd %s233, 0
          %s239 = smul.addr %s27, 16
          %s240 = smul.addr %s239, 8
          %s241 = scalar_lea.hbm %s2, %s240
          %s242 = sshll.u32 %s241, 4
          %s243 = int_to_ptr.hbm [resolvable:$true] %s242
          %s244 = sshll.u32 %s236, 4
          %s245 = int_to_ptr.vmem [resolvable:$true] %s244
          %250 = dma.hbm_to_vmem [thread:$0]  %s243, 2048, %s245, %s233, 128, 128, 8
        $region28: #{tpu_custom_call.1} parent=23 // pred_fallthru
          _
      $region24: #{tpu_custom_call.1} parent=5 // pred_fallthru
        _
      %p251 = scmp.le.s32.totalorder 1, %s20
      %p252 = scmp.lt.s32.totalorder %s20, 11
      %p253 = pnand %p251, %p252
      %p254 = pneg %p253
      // Predicated region
      $region29: #{tpu_custom_call.1} parent=5 // pred_check
        _
      $region30: #{tpu_custom_call.1} parent=5 // pred_check_branch
        %256 = sbr.rel (%p253) target = $region32
      $region31: #{tpu_custom_call.1} parent=5 // pred_region
        %s257 = ssub.s32 %s20, 1
        // Predicated region
        $region33: #{tpu_custom_call.1} parent=31 // pred_check
          %p258 = pneg %p53
        $region34: #{tpu_custom_call.1} parent=31 // pred_check_branch
          %260 = sbr.rel (%p258) target = $region36
        $region35: #{tpu_custom_call.1} parent=31 // pred_region
          %262 = dma.done [#allocation5], 4096
        $region36: #{tpu_custom_call.1} parent=31 // pred_fallthru
          _
        // Predicated region
        $region37: #{tpu_custom_call.1} parent=31 // pred_check
          %p263 = pneg %p74
        $region38: #{tpu_custom_call.1} parent=31 // pred_check_branch
          %265 = sbr.rel (%p263) target = $region40
        $region39: #{tpu_custom_call.1} parent=31 // pred_region
          %267 = dma.done [#allocation8], 4096
        $region40: #{tpu_custom_call.1} parent=31 // pred_fallthru
          _
        %s268 = sand.u32 %s25, 1
        %s269 = scalar_lea.sflag [#allocation5], %s268
        %s270 = sand.u32 %s87, 1
        %s271 = smul.addr %s270, 128
        %s272 = scalar_lea.vmem [#allocation9], %s271
        // Predicated region
        $region41: #{tpu_custom_call.1} parent=31 // pred_check
          %p273 = pneg %p100
        $region42: #{tpu_custom_call.1} parent=31 // pred_check_branch
          %275 = sbr.rel (%p273) target = $region44
        $region43: #{tpu_custom_call.1} parent=31 // pred_region
          %277 = dma.done %s269, 2048
        $region44: #{tpu_custom_call.1} parent=31 // pred_fallthru
          _
        %p278 = pneg %p53
        %p279 = pneg %p50
        %p280 = pneg %p74
        %p281 = pneg %p71
        %s282 = sand.u32 %s25, 1
        %s283 = scalar_lea.sflag [#allocation5], %s282
        %s284 = sand.u32 %s87, 1
        %s285 = smul.addr %s284, 128
        %s286 = scalar_lea.vmem [#allocation9], %s285
        %p287 = pneg %p100
        %p288 = pneg %p97
        %p289 = pneg %p128
        %p290 = pneg %p125
        %s291 = sand.u32 %s115, 1
        %s292 = scalar_lea.sflag [#allocation6], %s291
        %s293 = sand.u32 %s115, 1
        %s294 = smul.addr %s293, 128
        %s295 = scalar_lea.vmem [#allocation10], %s294
        %p296 = pneg %p156
        %p297 = pneg %p153
        %s298 = sand.u32 %s25, 1
        %s299 = scalar_lea.sflag [#allocation12], %s298
        %s300 = sand.u32 %s143, 1
        %s301 = smul.addr %s300, 128
        %s302 = scalar_lea.vmem [#allocation11], %s301
        %p303 = pneg %p182
        %p304 = pneg %p179
        %s305 = sand.u32 %s25, 1
        %s306 = scalar_lea.sflag [#allocation12], %s305
        %s307 = sand.u32 %s169, 1
        %s308 = smul.addr %s307, 128
        %s309 = scalar_lea.vmem [#allocation13], %s308
        %s310 = smul.u32 16, %s30
        %s311 = smul.u32 16, %s30
        %s312 = smul.u32 16, %s30
        %p313 = scmp.eq.s32.totalorder %s29, 0
        %p314 = scmp.eq.s32.totalorder %s30, 0
        %p315 = pnand %p313, %p314
        %p316 = pneg %p315
        // Predicated region
        $region45: #{tpu_custom_call.1} parent=31 // pred_check
          _
        $region46: #{tpu_custom_call.1} parent=31 // pred_check_branch
          %318 = sbr.rel (%p315) target = $region48
        $region47: #{tpu_custom_call.1} parent=31 // pred_region
          %v319 = vld [vmem:[#allocation4] sm:$0xff]
          %v320 = vld [vmem:[#allocation4 + $0x8] sm:$0xff]
          %v321 = vld [vmem:[#allocation4 + $0x10] sm:$0xff]
          %v322 = vld [vmem:[#allocation4 + $0x18] sm:$0xff]
          %v323 = vld [vmem:[#allocation4 + $0x20] sm:$0xff]
          %v324 = vld [vmem:[#allocation4 + $0x28] sm:$0xff]
          %v325 = vld [vmem:[#allocation4 + $0x30] sm:$0xff]
          %v326 = vld [vmem:[#allocation4 + $0x38] sm:$0xff]
          %v327 = vld [vmem:[#allocation4 + $0x40] sm:$0xff]
          %v328 = vld [vmem:[#allocation4 + $0x48] sm:$0xff]
          %v329 = vld [vmem:[#allocation4 + $0x50] sm:$0xff]
          %v330 = vld [vmem:[#allocation4 + $0x58] sm:$0xff]
          %v331 = vld [vmem:[#allocation4 + $0x60] sm:$0xff]
          %v332 = vld [vmem:[#allocation4 + $0x68] sm:$0xff]
          %v333 = vld [vmem:[#allocation4 + $0x70] sm:$0xff]
          %v334 = vld [vmem:[#allocation4 + $0x78] sm:$0xff]
          %v335 = vld [vmem:[#allocation4 + $0x80] sm:$0xff]
          %v336 = vld [vmem:[#allocation4 + $0x88] sm:$0xff]
          %v337 = vld [vmem:[#allocation4 + $0x90] sm:$0xff]
          %v338 = vld [vmem:[#allocation4 + $0x98] sm:$0xff]
          %v339 = vld [vmem:[#allocation4 + $0xa0] sm:$0xff]
          %v340 = vld [vmem:[#allocation4 + $0xa8] sm:$0xff]
          %v341 = vld [vmem:[#allocation4 + $0xb0] sm:$0xff]
          %v342 = vld [vmem:[#allocation4 + $0xb8] sm:$0xff]
          %v343 = vld [vmem:[#allocation4 + $0xc0] sm:$0xff]
          %v344 = vld [vmem:[#allocation4 + $0xc8] sm:$0xff]
          %v345 = vld [vmem:[#allocation4 + $0xd0] sm:$0xff]
          %v346 = vld [vmem:[#allocation4 + $0xd8] sm:$0xff]
          %v347 = vld [vmem:[#allocation4 + $0xe0] sm:$0xff]
          %v348 = vld [vmem:[#allocation4 + $0xe8] sm:$0xff]
          %v349 = vld [vmem:[#allocation4 + $0xf0] sm:$0xff]
          %v350 = vld [vmem:[#allocation4 + $0xf8] sm:$0xff]
          %351 = vst [vmem:[#allocation2] sm:$0xff] %v319
          %352 = vst [vmem:[#allocation2 + $0x8] sm:$0xff] %v320
          %353 = vst [vmem:[#allocation2 + $0x10] sm:$0xff] %v321
          %354 = vst [vmem:[#allocation2 + $0x18] sm:$0xff] %v322
          %355 = vst [vmem:[#allocation2 + $0x20] sm:$0xff] %v323
          %356 = vst [vmem:[#allocation2 + $0x28] sm:$0xff] %v324
          %357 = vst [vmem:[#allocation2 + $0x30] sm:$0xff] %v325
          %358 = vst [vmem:[#allocation2 + $0x38] sm:$0xff] %v326
          %359 = vst [vmem:[#allocation2 + $0x40] sm:$0xff] %v327
          %360 = vst [vmem:[#allocation2 + $0x48] sm:$0xff] %v328
          %361 = vst [vmem:[#allocation2 + $0x50] sm:$0xff] %v329
          %362 = vst [vmem:[#allocation2 + $0x58] sm:$0xff] %v330
          %363 = vst [vmem:[#allocation2 + $0x60] sm:$0xff] %v331
          %364 = vst [vmem:[#allocation2 + $0x68] sm:$0xff] %v332
          %365 = vst [vmem:[#allocation2 + $0x70] sm:$0xff] %v333
          %366 = vst [vmem:[#allocation2 + $0x78] sm:$0xff] %v334
          %367 = vst [vmem:[#allocation2 + $0x80] sm:$0xff] %v335
          %368 = vst [vmem:[#allocation2 + $0x88] sm:$0xff] %v336
          %369 = vst [vmem:[#allocation2 + $0x90] sm:$0xff] %v337
          %370 = vst [vmem:[#allocation2 + $0x98] sm:$0xff] %v338
          %371 = vst [vmem:[#allocation2 + $0xa0] sm:$0xff] %v339
          %372 = vst [vmem:[#allocation2 + $0xa8] sm:$0xff] %v340
          %373 = vst [vmem:[#allocation2 + $0xb0] sm:$0xff] %v341
          %374 = vst [vmem:[#allocation2 + $0xb8] sm:$0xff] %v342
          %375 = vst [vmem:[#allocation2 + $0xc0] sm:$0xff] %v343
          %376 = vst [vmem:[#allocation2 + $0xc8] sm:$0xff] %v344
          %377 = vst [vmem:[#allocation2 + $0xd0] sm:$0xff] %v345
          %378 = vst [vmem:[#allocation2 + $0xd8] sm:$0xff] %v346
          %379 = vst [vmem:[#allocation2 + $0xe0] sm:$0xff] %v347
          %380 = vst [vmem:[#allocation2 + $0xe8] sm:$0xff] %v348
          %381 = vst [vmem:[#allocation2 + $0xf0] sm:$0xff] %v349
          %382 = vst [vmem:[#allocation2 + $0xf8] sm:$0xff] %v350
        $region48: #{tpu_custom_call.1} parent=31 // pred_fallthru
          _
        %s383 = smul.u32 %s30, 128
        %p384 = scmp.lt.s32.totalorder %s29, 0
        %s385 = ssub.s32 0, %s29
        %s386 = scalar_select %p384, %s385, %s29
        %s387 = sand.u32 %s386, 1
        %s388 = ssub.s32 0, %s387
        %s389 = scalar_select %p384, %s388, %s387
        %p390 = scmp.ne.s32.totalorder %s389, 0
        %p391 = scmp.lt.s32.totalorder %s389, 0
        %p392 = pnand %p391, %p390
        %p393 = pneg %p392
        %s394 = sadd.s32 %s389, 2
        %s395 = scalar_select %p393, %s394, %s389
        %p396 = scmp.eq.s32.totalorder %s395, 0
        // Predicated region
        $region49: #{tpu_custom_call.1} parent=31 // pred_check
          %p397 = pneg %p396
        $region50: #{tpu_custom_call.1} parent=31 // pred_check_branch
          %399 = sbr.rel (%p397) target = $region52
        $region51: #{tpu_custom_call.1} parent=31 // pred_region
          %s400 = sshra.s32 %s383, 3
          %s401 = sand.u32 %s383, 7
          %s402 = smul.u32 %s400, 2
          %s403 = smul.addr %s402, 4
          %s404 = scalar_lea.vmem [#allocation7], %s403
          %v405 = vld [vmem:[%s404] sm:$0xff]
          %v406 = vld [vmem:[%s404 + $0x8] sm:$0xff]
          %v407 = vld [vmem:[%s404 + $0x10] sm:$0xff]
          %v408 = vld [vmem:[%s404 + $0x18] sm:$0xff]
          %v409 = vld [vmem:[%s404 + $0x20] sm:$0xff]
          %v410 = vld [vmem:[%s404 + $0x28] sm:$0xff]
          %v411 = vld [vmem:[%s404 + $0x30] sm:$0xff]
          %v412 = vld [vmem:[%s404 + $0x38] sm:$0xff]
          %v413 = vld [vmem:[%s404 + $0x40] sm:$0xff]
          %v414 = vld [vmem:[%s404 + $0x48] sm:$0xff]
          %v415 = vld [vmem:[%s404 + $0x50] sm:$0xff]
          %v416 = vld [vmem:[%s404 + $0x58] sm:$0xff]
          %v417 = vld [vmem:[%s404 + $0x60] sm:$0xff]
          %v418 = vld [vmem:[%s404 + $0x68] sm:$0xff]
          %v419 = vld [vmem:[%s404 + $0x70] sm:$0xff]
          %v420 = vld [vmem:[%s404 + $0x78] sm:$0xff]
          %v421 = vunpack.c.l.bf16 %v405
          %v422 = vunpack.c.h.bf16 %v405
          %v423 = vunpack.c.l.bf16 %v406
          %v424 = vunpack.c.h.bf16 %v406
          %v425 = vunpack.c.l.bf16 %v407
          %v426 = vunpack.c.h.bf16 %v407
          %v427 = vunpack.c.l.bf16 %v408
          %v428 = vunpack.c.h.bf16 %v408
          %v429 = vunpack.c.l.bf16 %v409
          %v430 = vunpack.c.h.bf16 %v409
          %v431 = vunpack.c.l.bf16 %v410
          %v432 = vunpack.c.h.bf16 %v410
          %v433 = vunpack.c.l.bf16 %v411
          %v434 = vunpack.c.h.bf16 %v411
          %v435 = vunpack.c.l.bf16 %v412
          %v436 = vunpack.c.h.bf16 %v412
          %v437 = vunpack.c.l.bf16 %v413
          %v438 = vunpack.c.h.bf16 %v413
          %v439 = vunpack.c.l.bf16 %v414
          %v440 = vunpack.c.h.bf16 %v414
          %v441 = vunpack.c.l.bf16 %v415
          %v442 = vunpack.c.h.bf16 %v415
          %v443 = vunpack.c.l.bf16 %v416
          %v444 = vunpack.c.h.bf16 %v416
          %v445 = vunpack.c.l.bf16 %v417
          %v446 = vunpack.c.h.bf16 %v417
          %v447 = vunpack.c.l.bf16 %v418
          %v448 = vunpack.c.h.bf16 %v418
          %v449 = vunpack.c.l.bf16 %v419
          %v450 = vunpack.c.h.bf16 %v419
          %v451 = vunpack.c.l.bf16 %v420
          %v452 = vunpack.c.h.bf16 %v420
          %v453 = vld [vmem:[#allocation2] sm:$0xff]
          %v454 = vld [vmem:[#allocation2 + $0x8] sm:$0xff]
          %v455 = vld [vmem:[#allocation2 + $0x10] sm:$0xff]
          %v456 = vld [vmem:[#allocation2 + $0x18] sm:$0xff]
          %v457 = vld [vmem:[#allocation2 + $0x20] sm:$0xff]
          %v458 = vld [vmem:[#allocation2 + $0x28] sm:$0xff]
          %v459 = vld [vmem:[#allocation2 + $0x30] sm:$0xff]
          %v460 = vld [vmem:[#allocation2 + $0x38] sm:$0xff]
          %v461 = vld [vmem:[#allocation2 + $0x40] sm:$0xff]
          %v462 = vld [vmem:[#allocation2 + $0x48] sm:$0xff]
          %v463 = vld [vmem:[#allocation2 + $0x50] sm:$0xff]
          %v464 = vld [vmem:[#allocation2 + $0x58] sm:$0xff]
          %v465 = vld [vmem:[#allocation2 + $0x60] sm:$0xff]
          %v466 = vld [vmem:[#allocation2 + $0x68] sm:$0xff]
          %v467 = vld [vmem:[#allocation2 + $0x70] sm:$0xff]
          %v468 = vld [vmem:[#allocation2 + $0x78] sm:$0xff]
          %v469 = vld [vmem:[#allocation2 + $0x80] sm:$0xff]
          %v470 = vld [vmem:[#allocation2 + $0x88] sm:$0xff]
          %v471 = vld [vmem:[#allocation2 + $0x90] sm:$0xff]
          %v472 = vld [vmem:[#allocation2 + $0x98] sm:$0xff]
          %v473 = vld [vmem:[#allocation2 + $0xa0] sm:$0xff]
          %v474 = vld [vmem:[#allocation2 + $0xa8] sm:$0xff]
          %v475 = vld [vmem:[#allocation2 + $0xb0] sm:$0xff]
          %v476 = vld [vmem:[#allocation2 + $0xb8] sm:$0xff]
          %v477 = vld [vmem:[#allocation2 + $0xc0] sm:$0xff]
          %v478 = vld [vmem:[#allocation2 + $0xc8] sm:$0xff]
          %v479 = vld [vmem:[#allocation2 + $0xd0] sm:$0xff]
          %v480 = vld [vmem:[#allocation2 + $0xd8] sm:$0xff]
          %v481 = vld [vmem:[#allocation2 + $0xe0] sm:$0xff]
          %v482 = vld [vmem:[#allocation2 + $0xe8] sm:$0xff]
          %v483 = vld [vmem:[#allocation2 + $0xf0] sm:$0xff]
          %v484 = vld [vmem:[#allocation2 + $0xf8] sm:$0xff]
          %485 = vmatpush.msra.mxu0 %v468
          %486 = vmatpush.msra.mxu0 %v467
          %487 = vmatpush.msra.mxu0 %v466
          %488 = vmatpush.msra.mxu0 %v465
          %489 = vmatpush.msra.mxu0 %v464
          %490 = vmatpush.msra.mxu0 %v463
          %491 = vmatpush.msra.mxu0 %v462
          %492 = vmatpush.msra.mxu0 %v461
          %493 = vmatpush.msra.mxu0 %v460
          %494 = vmatpush.msra.mxu0 %v459
          %495 = vmatpush.msra.mxu0 %v458
          %496 = vmatpush.msra.mxu0 %v457
          %497 = vmatpush.msra.mxu0 %v456
          %498 = vmatpush.msra.mxu0 %v455
          %499 = vmatpush.msra.mxu0 %v454
          %500 = vmatpush.msra.mxu0 %v453
          %501 = vmatmul.f32.gmra.mxu0 %v421
          %v502 = vpop.f32.mrf.mxu0
          %v503 = vadd.f32 0.0, %v502
          %504 = vmatmul.f32.gmra.mxu0 %v423
          %v505 = vpop.f32.mrf.mxu0
          %v506 = vadd.f32 0.0, %v505
          %507 = vmatmul.f32.gmra.mxu0 %v425
          %v508 = vpop.f32.mrf.mxu0
          %v509 = vadd.f32 0.0, %v508
          %510 = vmatmul.f32.gmra.mxu0 %v427
          %v511 = vpop.f32.mrf.mxu0
          %v512 = vadd.f32 0.0, %v511
          %513 = vmatmul.f32.gmra.mxu0 %v429
          %v514 = vpop.f32.mrf.mxu0
          %v515 = vadd.f32 0.0, %v514
          %516 = vmatmul.f32.gmra.mxu0 %v431
          %v517 = vpop.f32.mrf.mxu0
          %v518 = vadd.f32 0.0, %v517
          %519 = vmatmul.f32.gmra.mxu0 %v433
          %v520 = vpop.f32.mrf.mxu0
          %v521 = vadd.f32 0.0, %v520
          %522 = vmatmul.f32.gmra.mxu0 %v435
          %v523 = vpop.f32.mrf.mxu0
          %v524 = vadd.f32 0.0, %v523
          %525 = vmatmul.f32.gmra.mxu0 %v437
          %v526 = vpop.f32.mrf.mxu0
          %v527 = vadd.f32 0.0, %v526
          %528 = vmatmul.f32.gmra.mxu0 %v439
          %v529 = vpop.f32.mrf.mxu0
          %v530 = vadd.f32 0.0, %v529
          %531 = vmatmul.f32.gmra.mxu0 %v441
          %v532 = vpop.f32.mrf.mxu0
          %v533 = vadd.f32 0.0, %v532
          %534 = vmatmul.f32.gmra.mxu0 %v443
          %v535 = vpop.f32.mrf.mxu0
          %v536 = vadd.f32 0.0, %v535
          %537 = vmatmul.f32.gmra.mxu0 %v445
          %v538 = vpop.f32.mrf.mxu0
          %v539 = vadd.f32 0.0, %v538
          %540 = vmatmul.f32.gmra.mxu0 %v447
          %v541 = vpop.f32.mrf.mxu0
          %v542 = vadd.f32 0.0, %v541
          %543 = vmatmul.f32.gmra.mxu0 %v449
          %v544 = vpop.f32.mrf.mxu0
          %v545 = vadd.f32 0.0, %v544
          %546 = vmatmul.f32.gmra.mxu0 %v451
          %v547 = vpop.f32.mrf.mxu0
          %v548 = vadd.f32 0.0, %v547
          %549 = vdwg.mxu0
          %550 = vmatpush.msra.mxu0 %v484
          %551 = vmatpush.msra.mxu0 %v483
          %552 = vmatpush.msra.mxu0 %v482
          %553 = vmatpush.msra.mxu0 %v481
          %554 = vmatpush.msra.mxu0 %v480
          %555 = vmatpush.msra.mxu0 %v479
          %556 = vmatpush.msra.mxu0 %v478
          %557 = vmatpush.msra.mxu0 %v477
          %558 = vmatpush.msra.mxu0 %v476
          %559 = vmatpush.msra.mxu0 %v475
          %560 = vmatpush.msra.mxu0 %v474
          %561 = vmatpush.msra.mxu0 %v473
          %562 = vmatpush.msra.mxu0 %v472
          %563 = vmatpush.msra.mxu0 %v471
          %564 = vmatpush.msra.mxu0 %v470
          %565 = vmatpush.msra.mxu0 %v469
          %566 = vmatmul.f32.gmra.mxu0 %v422
          %v567 = vpop.f32.mrf.mxu0
          %v568 = vadd.f32 %v503, %v567
          %569 = vmatmul.f32.gmra.mxu0 %v424
          %v570 = vpop.f32.mrf.mxu0
          %v571 = vadd.f32 %v506, %v570
          %572 = vmatmul.f32.gmra.mxu0 %v426
          %v573 = vpop.f32.mrf.mxu0
          %v574 = vadd.f32 %v509, %v573
          %575 = vmatmul.f32.gmra.mxu0 %v428
          %v576 = vpop.f32.mrf.mxu0
          %v577 = vadd.f32 %v512, %v576
          %578 = vmatmul.f32.gmra.mxu0 %v430
          %v579 = vpop.f32.mrf.mxu0
          %v580 = vadd.f32 %v515, %v579
          %581 = vmatmul.f32.gmra.mxu0 %v432
          %v582 = vpop.f32.mrf.mxu0
          %v583 = vadd.f32 %v518, %v582
          %584 = vmatmul.f32.gmra.mxu0 %v434
          %v585 = vpop.f32.mrf.mxu0
          %v586 = vadd.f32 %v521, %v585
          %587 = vmatmul.f32.gmra.mxu0 %v436
          %v588 = vpop.f32.mrf.mxu0
          %v589 = vadd.f32 %v524, %v588
          %590 = vmatmul.f32.gmra.mxu0 %v438
          %v591 = vpop.f32.mrf.mxu0
          %v592 = vadd.f32 %v527, %v591
          %593 = vmatmul.f32.gmra.mxu0 %v440
          %v594 = vpop.f32.mrf.mxu0
          %v595 = vadd.f32 %v530, %v594
          %596 = vmatmul.f32.gmra.mxu0 %v442
          %v597 = vpop.f32.mrf.mxu0
          %v598 = vadd.f32 %v533, %v597
          %599 = vmatmul.f32.gmra.mxu0 %v444
          %v600 = vpop.f32.mrf.mxu0
          %v601 = vadd.f32 %v536, %v600
          %602 = vmatmul.f32.gmra.mxu0 %v446
          %v603 = vpop.f32.mrf.mxu0
          %v604 = vadd.f32 %v539, %v603
          %605 = vmatmul.f32.gmra.mxu0 %v448
          %v606 = vpop.f32.mrf.mxu0
          %v607 = vadd.f32 %v542, %v606
          %608 = vmatmul.f32.gmra.mxu0 %v450
          %v609 = vpop.f32.mrf.mxu0
          %v610 = vadd.f32 %v545, %v609
          %611 = vmatmul.f32.gmra.mxu0 %v452
          %v612 = vpop.f32.mrf.mxu0
          %v613 = vadd.f32 %v548, %v612
          %614 = vdwg.mxu0
          %v615 = vld [vmem:[%s272] sm:$0xff]
          %v616 = vld [vmem:[%s272 + $0x8] sm:$0xff]
          %v617 = vld [vmem:[%s272 + $0x10] sm:$0xff]
          %v618 = vld [vmem:[%s272 + $0x18] sm:$0xff]
          %v619 = vld [vmem:[%s272 + $0x20] sm:$0xff]
          %v620 = vld [vmem:[%s272 + $0x28] sm:$0xff]
          %v621 = vld [vmem:[%s272 + $0x30] sm:$0xff]
          %v622 = vld [vmem:[%s272 + $0x38] sm:$0xff]
          %v623 = vld [vmem:[%s272 + $0x40] sm:$0xff]
          %v624 = vld [vmem:[%s272 + $0x48] sm:$0xff]
          %v625 = vld [vmem:[%s272 + $0x50] sm:$0xff]
          %v626 = vld [vmem:[%s272 + $0x58] sm:$0xff]
          %v627 = vld [vmem:[%s272 + $0x60] sm:$0xff]
          %v628 = vld [vmem:[%s272 + $0x68] sm:$0xff]
          %v629 = vld [vmem:[%s272 + $0x70] sm:$0xff]
          %v630 = vld [vmem:[%s272 + $0x78] sm:$0xff]
          %631 = vmatpush.msra.mxu0 %v630
          %632 = vmatpush.msra.mxu0 %v629
          %633 = vmatpush.msra.mxu0 %v628
          %634 = vmatpush.msra.mxu0 %v627
          %635 = vmatpush.msra.mxu0 %v626
          %636 = vmatpush.msra.mxu0 %v625
          %637 = vmatpush.msra.mxu0 %v624
          %638 = vmatpush.msra.mxu0 %v623
          %639 = vmatpush.msra.mxu0 %v622
          %640 = vmatpush.msra.mxu0 %v621
          %641 = vmatpush.msra.mxu0 %v620
          %642 = vmatpush.msra.mxu0 %v619
          %643 = vmatpush.msra.mxu0 %v618
          %644 = vmatpush.msra.mxu0 %v617
          %645 = vmatpush.msra.mxu0 %v616
          %646 = vmatpush.msra.mxu0 %v615
          %647 = vmatmul.f32.gmra.mxu0 %v568
          %v648 = vpop.f32.mrf.mxu0
          %v649 = vadd.f32 0.0, %v648
          %650 = vmatmul.f32.gmra.mxu0 %v571
          %v651 = vpop.f32.mrf.mxu0
          %v652 = vadd.f32 0.0, %v651
          %653 = vmatmul.f32.gmra.mxu0 %v574
          %v654 = vpop.f32.mrf.mxu0
          %v655 = vadd.f32 0.0, %v654
          %656 = vmatmul.f32.gmra.mxu0 %v577
          %v657 = vpop.f32.mrf.mxu0
          %v658 = vadd.f32 0.0, %v657
          %659 = vmatmul.f32.gmra.mxu0 %v580
          %v660 = vpop.f32.mrf.mxu0
          %v661 = vadd.f32 0.0, %v660
          %662 = vmatmul.f32.gmra.mxu0 %v583
          %v663 = vpop.f32.mrf.mxu0
          %v664 = vadd.f32 0.0, %v663
          %665 = vmatmul.f32.gmra.mxu0 %v586
          %v666 = vpop.f32.mrf.mxu0
          %v667 = vadd.f32 0.0, %v666
          %668 = vmatmul.f32.gmra.mxu0 %v589
          %v669 = vpop.f32.mrf.mxu0
          %v670 = vadd.f32 0.0, %v669
          %671 = vmatmul.f32.gmra.mxu0 %v592
          %v672 = vpop.f32.mrf.mxu0
          %v673 = vadd.f32 0.0, %v672
          %674 = vmatmul.f32.gmra.mxu0 %v595
          %v675 = vpop.f32.mrf.mxu0
          %v676 = vadd.f32 0.0, %v675
          %677 = vmatmul.f32.gmra.mxu0 %v598
          %v678 = vpop.f32.mrf.mxu0
          %v679 = vadd.f32 0.0, %v678
          %680 = vmatmul.f32.gmra.mxu0 %v601
          %v681 = vpop.f32.mrf.mxu0
          %v682 = vadd.f32 0.0, %v681
          %683 = vmatmul.f32.gmra.mxu0 %v604
          %v684 = vpop.f32.mrf.mxu0
          %v685 = vadd.f32 0.0, %v684
          %686 = vmatmul.f32.gmra.mxu0 %v607
          %v687 = vpop.f32.mrf.mxu0
          %v688 = vadd.f32 0.0, %v687
          %689 = vmatmul.f32.gmra.mxu0 %v610
          %v690 = vpop.f32.mrf.mxu0
          %v691 = vadd.f32 0.0, %v690
          %692 = vmatmul.f32.gmra.mxu0 %v613
          %v693 = vpop.f32.mrf.mxu0
          %v694 = vadd.f32 0.0, %v693
          %695 = vdwg.mxu0
          %696 = vst [vmem:[%s295] sm:$0xff] %v568
          %697 = vst [vmem:[%s295 + $0x8] sm:$0xff] %v571
          %698 = vst [vmem:[%s295 + $0x10] sm:$0xff] %v574
          %699 = vst [vmem:[%s295 + $0x18] sm:$0xff] %v577
          %700 = vst [vmem:[%s295 + $0x20] sm:$0xff] %v580
          %701 = vst [vmem:[%s295 + $0x28] sm:$0xff] %v583
          %702 = vst [vmem:[%s295 + $0x30] sm:$0xff] %v586
          %703 = vst [vmem:[%s295 + $0x38] sm:$0xff] %v589
          %704 = vst [vmem:[%s295 + $0x40] sm:$0xff] %v592
          %705 = vst [vmem:[%s295 + $0x48] sm:$0xff] %v595
          %706 = vst [vmem:[%s295 + $0x50] sm:$0xff] %v598
          %707 = vst [vmem:[%s295 + $0x58] sm:$0xff] %v601
          %708 = vst [vmem:[%s295 + $0x60] sm:$0xff] %v604
          %709 = vst [vmem:[%s295 + $0x68] sm:$0xff] %v607
          %710 = vst [vmem:[%s295 + $0x70] sm:$0xff] %v610
          %711 = vst [vmem:[%s295 + $0x78] sm:$0xff] %v613
          %712 = vst [vmem:[%s302] sm:$0xff] %v649
          %713 = vst [vmem:[%s302 + $0x8] sm:$0xff] %v652
          %714 = vst [vmem:[%s302 + $0x10] sm:$0xff] %v655
          %715 = vst [vmem:[%s302 + $0x18] sm:$0xff] %v658
          %716 = vst [vmem:[%s302 + $0x20] sm:$0xff] %v661
          %717 = vst [vmem:[%s302 + $0x28] sm:$0xff] %v664
          %718 = vst [vmem:[%s302 + $0x30] sm:$0xff] %v667
          %719 = vst [vmem:[%s302 + $0x38] sm:$0xff] %v670
          %720 = vst [vmem:[%s302 + $0x40] sm:$0xff] %v673
          %721 = vst [vmem:[%s302 + $0x48] sm:$0xff] %v676
          %722 = vst [vmem:[%s302 + $0x50] sm:$0xff] %v679
          %723 = vst [vmem:[%s302 + $0x58] sm:$0xff] %v682
          %724 = vst [vmem:[%s302 + $0x60] sm:$0xff] %v685
          %725 = vst [vmem:[%s302 + $0x68] sm:$0xff] %v688
          %726 = vst [vmem:[%s302 + $0x70] sm:$0xff] %v691
          %727 = vst [vmem:[%s302 + $0x78] sm:$0xff] %v694
          %v728 = vxor.u32 %v649, 2147483648
          %v729 = vxor.u32 %v652, 2147483648
          %v730 = vxor.u32 %v655, 2147483648
          %v731 = vxor.u32 %v658, 2147483648
          %v732 = vxor.u32 %v661, 2147483648
          %v733 = vxor.u32 %v664, 2147483648
          %v734 = vxor.u32 %v667, 2147483648
          %v735 = vxor.u32 %v670, 2147483648
          %v736 = vxor.u32 %v673, 2147483648
          %v737 = vxor.u32 %v676, 2147483648
          %v738 = vxor.u32 %v679, 2147483648
          %v739 = vxor.u32 %v682, 2147483648
          %v740 = vxor.u32 %v685, 2147483648
          %v741 = vxor.u32 %v688, 2147483648
          %v742 = vxor.u32 %v691, 2147483648
          %v743 = vxor.u32 %v694, 2147483648
          %v744 = vmul.f32 %v728, 1.442695
          %v745 = vpow.pop %v744
          %v746 = vmul.f32 %v729, 1.442695
          %v747 = vpow.pop %v746
          %v748 = vmul.f32 %v730, 1.442695
          %v749 = vpow.pop %v748
          %v750 = vmul.f32 %v731, 1.442695
          %v751 = vpow.pop %v750
          %v752 = vmul.f32 %v732, 1.442695
          %v753 = vpow.pop %v752
          %v754 = vmul.f32 %v733, 1.442695
          %v755 = vpow.pop %v754
          %v756 = vmul.f32 %v734, 1.442695
          %v757 = vpow.pop %v756
          %v758 = vmul.f32 %v735, 1.442695
          %v759 = vpow.pop %v758
          %v760 = vmul.f32 %v736, 1.442695
          %v761 = vpow.pop %v760
          %v762 = vmul.f32 %v737, 1.442695
          %v763 = vpow.pop %v762
          %v764 = vmul.f32 %v738, 1.442695
          %v765 = vpow.pop %v764
          %v766 = vmul.f32 %v739, 1.442695
          %v767 = vpow.pop %v766
          %v768 = vmul.f32 %v740, 1.442695
          %v769 = vpow.pop %v768
          %v770 = vmul.f32 %v741, 1.442695
          %v771 = vpow.pop %v770
          %v772 = vmul.f32 %v742, 1.442695
          %v773 = vpow.pop %v772
          %v774 = vmul.f32 %v743, 1.442695
          %v775 = vpow.pop %v774
          %v776 = vadd.f32 %v745, 1.0
          %v777 = vadd.f32 %v747, 1.0
          %v778 = vadd.f32 %v749, 1.0
          %v779 = vadd.f32 %v751, 1.0
          %v780 = vadd.f32 %v753, 1.0
          %v781 = vadd.f32 %v755, 1.0
          %v782 = vadd.f32 %v757, 1.0
          %v783 = vadd.f32 %v759, 1.0
          %v784 = vadd.f32 %v761, 1.0
          %v785 = vadd.f32 %v763, 1.0
          %v786 = vadd.f32 %v765, 1.0
          %v787 = vadd.f32 %v767, 1.0
          %v788 = vadd.f32 %v769, 1.0
          %v789 = vadd.f32 %v771, 1.0
          %v790 = vadd.f32 %v773, 1.0
          %v791 = vadd.f32 %v775, 1.0
          %v792 = vrcp.pop %v776
          %v793 = vmul.f32 %v776, %v792
          %v794 = vsub.f32 1.0, %v793
          %v795 = vmul.f32 %v792, %v794
          %v796 = vadd.f32 %v792, %v795
          %vm797 = vweird.f32 %v776
          %vm798 = vweird.f32 %v792
          %vm799 = vmor %vm797, %vm798
          %v800 = vsel %vm799, %v792, %v796
          %v801 = vand.u32 2147483647, %v776
          %vm802 = vcmp.eq.f32.partialorder %v801, 8.507059e+37
          %v803 = vand.u32 %v776, 2147483648
          %v804 = vor.u32 1.1754944e-38, %v803
          %v805 = vsel %vm802, %v804, %v800
          %v806 = vmul.f32 1.0, %v805
          %v807 = vrcp.pop %v777
          %v808 = vmul.f32 %v777, %v807
          %v809 = vsub.f32 1.0, %v808
          %v810 = vmul.f32 %v807, %v809
          %v811 = vadd.f32 %v807, %v810
          %vm812 = vweird.f32 %v777
          %vm813 = vweird.f32 %v807
          %vm814 = vmor %vm812, %vm813
          %v815 = vsel %vm814, %v807, %v811
          %v816 = vand.u32 2147483647, %v777
          %vm817 = vcmp.eq.f32.partialorder %v816, 8.507059e+37
          %v818 = vand.u32 %v777, 2147483648
          %v819 = vor.u32 1.1754944e-38, %v818
          %v820 = vsel %vm817, %v819, %v815
          %v821 = vmul.f32 1.0, %v820
          %v822 = vrcp.pop %v778
          %v823 = vmul.f32 %v778, %v822
          %v824 = vsub.f32 1.0, %v823
          %v825 = vmul.f32 %v822, %v824
          %v826 = vadd.f32 %v822, %v825
          %vm827 = vweird.f32 %v778
          %vm828 = vweird.f32 %v822
          %vm829 = vmor %vm827, %vm828
          %v830 = vsel %vm829, %v822, %v826
          %v831 = vand.u32 2147483647, %v778
          %vm832 = vcmp.eq.f32.partialorder %v831, 8.507059e+37
          %v833 = vand.u32 %v778, 2147483648
          %v834 = vor.u32 1.1754944e-38, %v833
          %v835 = vsel %vm832, %v834, %v830
          %v836 = vmul.f32 1.0, %v835
          %v837 = vrcp.pop %v779
          %v838 = vmul.f32 %v779, %v837
          %v839 = vsub.f32 1.0, %v838
          %v840 = vmul.f32 %v837, %v839
          %v841 = vadd.f32 %v837, %v840
          %vm842 = vweird.f32 %v779
          %vm843 = vweird.f32 %v837
          %vm844 = vmor %vm842, %vm843
          %v845 = vsel %vm844, %v837, %v841
          %v846 = vand.u32 2147483647, %v779
          %vm847 = vcmp.eq.f32.partialorder %v846, 8.507059e+37
          %v848 = vand.u32 %v779, 2147483648
          %v849 = vor.u32 1.1754944e-38, %v848
          %v850 = vsel %vm847, %v849, %v845
          %v851 = vmul.f32 1.0, %v850
          %v852 = vrcp.pop %v780
          %v853 = vmul.f32 %v780, %v852
          %v854 = vsub.f32 1.0, %v853
          %v855 = vmul.f32 %v852, %v854
          %v856 = vadd.f32 %v852, %v855
          %vm857 = vweird.f32 %v780
          %vm858 = vweird.f32 %v852
          %vm859 = vmor %vm857, %vm858
          %v860 = vsel %vm859, %v852, %v856
          %v861 = vand.u32 2147483647, %v780
          %vm862 = vcmp.eq.f32.partialorder %v861, 8.507059e+37
          %v863 = vand.u32 %v780, 2147483648
          %v864 = vor.u32 1.1754944e-38, %v863
          %v865 = vsel %vm862, %v864, %v860
          %v866 = vmul.f32 1.0, %v865
          %v867 = vrcp.pop %v781
          %v868 = vmul.f32 %v781, %v867
          %v869 = vsub.f32 1.0, %v868
          %v870 = vmul.f32 %v867, %v869
          %v871 = vadd.f32 %v867, %v870
          %vm872 = vweird.f32 %v781
          %vm873 = vweird.f32 %v867
          %vm874 = vmor %vm872, %vm873
          %v875 = vsel %vm874, %v867, %v871
          %v876 = vand.u32 2147483647, %v781
          %vm877 = vcmp.eq.f32.partialorder %v876, 8.507059e+37
          %v878 = vand.u32 %v781, 2147483648
          %v879 = vor.u32 1.1754944e-38, %v878
          %v880 = vsel %vm877, %v879, %v875
          %v881 = vmul.f32 1.0, %v880
          %v882 = vrcp.pop %v782
          %v883 = vmul.f32 %v782, %v882
          %v884 = vsub.f32 1.0, %v883
          %v885 = vmul.f32 %v882, %v884
          %v886 = vadd.f32 %v882, %v885
          %vm887 = vweird.f32 %v782
          %vm888 = vweird.f32 %v882
          %vm889 = vmor %vm887, %vm888
          %v890 = vsel %vm889, %v882, %v886
          %v891 = vand.u32 2147483647, %v782
          %vm892 = vcmp.eq.f32.partialorder %v891, 8.507059e+37
          %v893 = vand.u32 %v782, 2147483648
          %v894 = vor.u32 1.1754944e-38, %v893
          %v895 = vsel %vm892, %v894, %v890
          %v896 = vmul.f32 1.0, %v895
          %v897 = vrcp.pop %v783
          %v898 = vmul.f32 %v783, %v897
          %v899 = vsub.f32 1.0, %v898
          %v900 = vmul.f32 %v897, %v899
          %v901 = vadd.f32 %v897, %v900
          %vm902 = vweird.f32 %v783
          %vm903 = vweird.f32 %v897
          %vm904 = vmor %vm902, %vm903
          %v905 = vsel %vm904, %v897, %v901
          %v906 = vand.u32 2147483647, %v783
          %vm907 = vcmp.eq.f32.partialorder %v906, 8.507059e+37
          %v908 = vand.u32 %v783, 2147483648
          %v909 = vor.u32 1.1754944e-38, %v908
          %v910 = vsel %vm907, %v909, %v905
          %v911 = vmul.f32 1.0, %v910
          %v912 = vrcp.pop %v784
          %v913 = vmul.f32 %v784, %v912
          %v914 = vsub.f32 1.0, %v913
          %v915 = vmul.f32 %v912, %v914
          %v916 = vadd.f32 %v912, %v915
          %vm917 = vweird.f32 %v784
          %vm918 = vweird.f32 %v912
          %vm919 = vmor %vm917, %vm918
          %v920 = vsel %vm919, %v912, %v916
          %v921 = vand.u32 2147483647, %v784
          %vm922 = vcmp.eq.f32.partialorder %v921, 8.507059e+37
          %v923 = vand.u32 %v784, 2147483648
          %v924 = vor.u32 1.1754944e-38, %v923
          %v925 = vsel %vm922, %v924, %v920
          %v926 = vmul.f32 1.0, %v925
          %v927 = vrcp.pop %v785
          %v928 = vmul.f32 %v785, %v927
          %v929 = vsub.f32 1.0, %v928
          %v930 = vmul.f32 %v927, %v929
          %v931 = vadd.f32 %v927, %v930
          %vm932 = vweird.f32 %v785
          %vm933 = vweird.f32 %v927
          %vm934 = vmor %vm932, %vm933
          %v935 = vsel %vm934, %v927, %v931
          %v936 = vand.u32 2147483647, %v785
          %vm937 = vcmp.eq.f32.partialorder %v936, 8.507059e+37
          %v938 = vand.u32 %v785, 2147483648
          %v939 = vor.u32 1.1754944e-38, %v938
          %v940 = vsel %vm937, %v939, %v935
          %v941 = vmul.f32 1.0, %v940
          %v942 = vrcp.pop %v786
          %v943 = vmul.f32 %v786, %v942
          %v944 = vsub.f32 1.0, %v943
          %v945 = vmul.f32 %v942, %v944
          %v946 = vadd.f32 %v942, %v945
          %vm947 = vweird.f32 %v786
          %vm948 = vweird.f32 %v942
          %vm949 = vmor %vm947, %vm948
          %v950 = vsel %vm949, %v942, %v946
          %v951 = vand.u32 2147483647, %v786
          %vm952 = vcmp.eq.f32.partialorder %v951, 8.507059e+37
          %v953 = vand.u32 %v786, 2147483648
          %v954 = vor.u32 1.1754944e-38, %v953
          %v955 = vsel %vm952, %v954, %v950
          %v956 = vmul.f32 1.0, %v955
          %v957 = vrcp.pop %v787
          %v958 = vmul.f32 %v787, %v957
          %v959 = vsub.f32 1.0, %v958
          %v960 = vmul.f32 %v957, %v959
          %v961 = vadd.f32 %v957, %v960
          %vm962 = vweird.f32 %v787
          %vm963 = vweird.f32 %v957
          %vm964 = vmor %vm962, %vm963
          %v965 = vsel %vm964, %v957, %v961
          %v966 = vand.u32 2147483647, %v787
          %vm967 = vcmp.eq.f32.partialorder %v966, 8.507059e+37
          %v968 = vand.u32 %v787, 2147483648
          %v969 = vor.u32 1.1754944e-38, %v968
          %v970 = vsel %vm967, %v969, %v965
          %v971 = vmul.f32 1.0, %v970
          %v972 = vrcp.pop %v788
          %v973 = vmul.f32 %v788, %v972
          %v974 = vsub.f32 1.0, %v973
          %v975 = vmul.f32 %v972, %v974
          %v976 = vadd.f32 %v972, %v975
          %vm977 = vweird.f32 %v788
          %vm978 = vweird.f32 %v972
          %vm979 = vmor %vm977, %vm978
          %v980 = vsel %vm979, %v972, %v976
          %v981 = vand.u32 2147483647, %v788
          %vm982 = vcmp.eq.f32.partialorder %v981, 8.507059e+37
          %v983 = vand.u32 %v788, 2147483648
          %v984 = vor.u32 1.1754944e-38, %v983
          %v985 = vsel %vm982, %v984, %v980
          %v986 = vmul.f32 1.0, %v985
          %v987 = vrcp.pop %v789
          %v988 = vmul.f32 %v789, %v987
          %v989 = vsub.f32 1.0, %v988
          %v990 = vmul.f32 %v987, %v989
          %v991 = vadd.f32 %v987, %v990
          %vm992 = vweird.f32 %v789
          %vm993 = vweird.f32 %v987
          %vm994 = vmor %vm992, %vm993
          %v995 = vsel %vm994, %v987, %v991
          %v996 = vand.u32 2147483647, %v789
          %vm997 = vcmp.eq.f32.partialorder %v996, 8.507059e+37
          %v998 = vand.u32 %v789, 2147483648
          %v999 = vor.u32 1.1754944e-38, %v998
          %v1000 = vsel %vm997, %v999, %v995
          %v1001 = vmul.f32 1.0, %v1000
          %v1002 = vrcp.pop %v790
          %v1003 = vmul.f32 %v790, %v1002
          %v1004 = vsub.f32 1.0, %v1003
          %v1005 = vmul.f32 %v1002, %v1004
          %v1006 = vadd.f32 %v1002, %v1005
          %vm1007 = vweird.f32 %v790
          %vm1008 = vweird.f32 %v1002
          %vm1009 = vmor %vm1007, %vm1008
          %v1010 = vsel %vm1009, %v1002, %v1006
          %v1011 = vand.u32 2147483647, %v790
          %vm1012 = vcmp.eq.f32.partialorder %v1011, 8.507059e+37
          %v1013 = vand.u32 %v790, 2147483648
          %v1014 = vor.u32 1.1754944e-38, %v1013
          %v1015 = vsel %vm1012, %v1014, %v1010
          %v1016 = vmul.f32 1.0, %v1015
          %v1017 = vrcp.pop %v791
          %v1018 = vmul.f32 %v791, %v1017
          %v1019 = vsub.f32 1.0, %v1018
          %v1020 = vmul.f32 %v1017, %v1019
          %v1021 = vadd.f32 %v1017, %v1020
          %vm1022 = vweird.f32 %v791
          %vm1023 = vweird.f32 %v1017
          %vm1024 = vmor %vm1022, %vm1023
          %v1025 = vsel %vm1024, %v1017, %v1021
          %v1026 = vand.u32 2147483647, %v791
          %vm1027 = vcmp.eq.f32.partialorder %v1026, 8.507059e+37
          %v1028 = vand.u32 %v791, 2147483648
          %v1029 = vor.u32 1.1754944e-38, %v1028
          %v1030 = vsel %vm1027, %v1029, %v1025
          %v1031 = vmul.f32 1.0, %v1030
          %1032 = vst [vmem:[%s309] sm:$0xff] %v806
          %1033 = vst [vmem:[%s309 + $0x8] sm:$0xff] %v821
          %1034 = vst [vmem:[%s309 + $0x10] sm:$0xff] %v836
          %1035 = vst [vmem:[%s309 + $0x18] sm:$0xff] %v851
          %1036 = vst [vmem:[%s309 + $0x20] sm:$0xff] %v866
          %1037 = vst [vmem:[%s309 + $0x28] sm:$0xff] %v881
          %1038 = vst [vmem:[%s309 + $0x30] sm:$0xff] %v896
          %1039 = vst [vmem:[%s309 + $0x38] sm:$0xff] %v911
          %1040 = vst [vmem:[%s309 + $0x40] sm:$0xff] %v926
          %1041 = vst [vmem:[%s309 + $0x48] sm:$0xff] %v941
          %1042 = vst [vmem:[%s309 + $0x50] sm:$0xff] %v956
          %1043 = vst [vmem:[%s309 + $0x58] sm:$0xff] %v971
          %1044 = vst [vmem:[%s309 + $0x60] sm:$0xff] %v986
          %1045 = vst [vmem:[%s309 + $0x68] sm:$0xff] %v1001
          %1046 = vst [vmem:[%s309 + $0x70] sm:$0xff] %v1016
          %1047 = vst [vmem:[%s309 + $0x78] sm:$0xff] %v1031
          // Predicated region
          $region53: #{tpu_custom_call.1} parent=51 // pred_check
            %p1048 = pneg %p313
          $region54: #{tpu_custom_call.1} parent=51 // pred_check_branch
            %1050 = sbr.rel (%p1048) target = $region56
          $region55: #{tpu_custom_call.1} parent=51 // pred_region
            %v1051 = vmax.f32 %v649, 0.0
            %v1052 = vmax.f32 %v652, 0.0
            %v1053 = vmax.f32 %v655, 0.0
            %v1054 = vmax.f32 %v658, 0.0
            %v1055 = vmax.f32 %v661, 0.0
            %v1056 = vmax.f32 %v664, 0.0
            %v1057 = vmax.f32 %v667, 0.0
            %v1058 = vmax.f32 %v670, 0.0
            %v1059 = vmax.f32 %v673, 0.0
            %v1060 = vmax.f32 %v676, 0.0
            %v1061 = vmax.f32 %v679, 0.0
            %v1062 = vmax.f32 %v682, 0.0
            %v1063 = vmax.f32 %v685, 0.0
            %v1064 = vmax.f32 %v688, 0.0
            %v1065 = vmax.f32 %v691, 0.0
            %v1066 = vmax.f32 %v694, 0.0
            %s1067 = scalar_lea.vmem [#allocation3], %s383
            %1068 = vst [vmem:[%s1067] sm:$0xff] %v1051
            %1069 = vst [vmem:[%s1067 + $0x8] sm:$0xff] %v1052
            %1070 = vst [vmem:[%s1067 + $0x10] sm:$0xff] %v1053
            %1071 = vst [vmem:[%s1067 + $0x18] sm:$0xff] %v1054
            %1072 = vst [vmem:[%s1067 + $0x20] sm:$0xff] %v1055
            %1073 = vst [vmem:[%s1067 + $0x28] sm:$0xff] %v1056
            %1074 = vst [vmem:[%s1067 + $0x30] sm:$0xff] %v1057
            %1075 = vst [vmem:[%s1067 + $0x38] sm:$0xff] %v1058
            %1076 = vst [vmem:[%s1067 + $0x40] sm:$0xff] %v1059
            %1077 = vst [vmem:[%s1067 + $0x48] sm:$0xff] %v1060
            %1078 = vst [vmem:[%s1067 + $0x50] sm:$0xff] %v1061
            %1079 = vst [vmem:[%s1067 + $0x58] sm:$0xff] %v1062
            %1080 = vst [vmem:[%s1067 + $0x60] sm:$0xff] %v1063
            %1081 = vst [vmem:[%s1067 + $0x68] sm:$0xff] %v1064
            %1082 = vst [vmem:[%s1067 + $0x70] sm:$0xff] %v1065
            %1083 = vst [vmem:[%s1067 + $0x78] sm:$0xff] %v1066
          $region56: #{tpu_custom_call.1} parent=51 // pred_fallthru
            _
          %p1084 = scmp.eq.s32.totalorder %s29, 1
          // Predicated region
          $region57: #{tpu_custom_call.1} parent=51 // pred_check
            %p1085 = pneg %p1084
          $region58: #{tpu_custom_call.1} parent=51 // pred_check_branch
            %1087 = sbr.rel (%p1085) target = $region60
          $region59: #{tpu_custom_call.1} parent=51 // pred_region
            %v1088 = vmul.f32 %v649, %v806
            %v1089 = vmul.f32 %v652, %v821
            %v1090 = vmul.f32 %v655, %v836
            %v1091 = vmul.f32 %v658, %v851
            %v1092 = vmul.f32 %v661, %v866
            %v1093 = vmul.f32 %v664, %v881
            %v1094 = vmul.f32 %v667, %v896
            %v1095 = vmul.f32 %v670, %v911
            %v1096 = vmul.f32 %v673, %v926
            %v1097 = vmul.f32 %v676, %v941
            %v1098 = vmul.f32 %v679, %v956
            %v1099 = vmul.f32 %v682, %v971
            %v1100 = vmul.f32 %v685, %v986
            %v1101 = vmul.f32 %v688, %v1001
            %v1102 = vmul.f32 %v691, %v1016
            %v1103 = vmul.f32 %v694, %v1031
            %s1104 = scalar_lea.vmem [#allocation3], %s383
            %1105 = vst [vmem:[%s1104] sm:$0xff] %v1088
            %1106 = vst [vmem:[%s1104 + $0x8] sm:$0xff] %v1089
            %1107 = vst [vmem:[%s1104 + $0x10] sm:$0xff] %v1090
            %1108 = vst [vmem:[%s1104 + $0x18] sm:$0xff] %v1091
            %1109 = vst [vmem:[%s1104 + $0x20] sm:$0xff] %v1092
            %1110 = vst [vmem:[%s1104 + $0x28] sm:$0xff] %v1093
            %1111 = vst [vmem:[%s1104 + $0x30] sm:$0xff] %v1094
            %1112 = vst [vmem:[%s1104 + $0x38] sm:$0xff] %v1095
            %1113 = vst [vmem:[%s1104 + $0x40] sm:$0xff] %v1096
            %1114 = vst [vmem:[%s1104 + $0x48] sm:$0xff] %v1097
            %1115 = vst [vmem:[%s1104 + $0x50] sm:$0xff] %v1098
            %1116 = vst [vmem:[%s1104 + $0x58] sm:$0xff] %v1099
            %1117 = vst [vmem:[%s1104 + $0x60] sm:$0xff] %v1100
            %1118 = vst [vmem:[%s1104 + $0x68] sm:$0xff] %v1101
            %1119 = vst [vmem:[%s1104 + $0x70] sm:$0xff] %v1102
            %1120 = vst [vmem:[%s1104 + $0x78] sm:$0xff] %v1103
          $region60: #{tpu_custom_call.1} parent=51 // pred_fallthru
            _
          %p1121 = scmp.eq.s32.totalorder %s29, 2
          // Predicated region
          $region61: #{tpu_custom_call.1} parent=51 // pred_check
            %p1122 = pneg %p1121
          $region62: #{tpu_custom_call.1} parent=51 // pred_check_branch
            %1124 = sbr.rel (%p1122) target = $region64
          $region63: #{tpu_custom_call.1} parent=51 // pred_region
            %vm1125 = vcmp.gt.f32.partialorder %v649, 0.0
            %vm1126 = vcmp.gt.f32.partialorder %v652, 0.0
            %vm1127 = vcmp.gt.f32.partialorder %v655, 0.0
            %vm1128 = vcmp.gt.f32.partialorder %v658, 0.0
            %vm1129 = vcmp.gt.f32.partialorder %v661, 0.0
            %vm1130 = vcmp.gt.f32.partialorder %v664, 0.0
            %vm1131 = vcmp.gt.f32.partialorder %v667, 0.0
            %vm1132 = vcmp.gt.f32.partialorder %v670, 0.0
            %vm1133 = vcmp.gt.f32.partialorder %v673, 0.0
            %vm1134 = vcmp.gt.f32.partialorder %v676, 0.0
            %vm1135 = vcmp.gt.f32.partialorder %v679, 0.0
            %vm1136 = vcmp.gt.f32.partialorder %v682, 0.0
            %vm1137 = vcmp.gt.f32.partialorder %v685, 0.0
            %vm1138 = vcmp.gt.f32.partialorder %v688, 0.0
            %vm1139 = vcmp.gt.f32.partialorder %v691, 0.0
            %vm1140 = vcmp.gt.f32.partialorder %v694, 0.0
            %v1141 = vmul.f32 %v649, 1.442695
            %v1142 = vpow.pop %v1141
            %v1143 = vmul.f32 %v652, 1.442695
            %v1144 = vpow.pop %v1143
            %v1145 = vmul.f32 %v655, 1.442695
            %v1146 = vpow.pop %v1145
            %v1147 = vmul.f32 %v658, 1.442695
            %v1148 = vpow.pop %v1147
            %v1149 = vmul.f32 %v661, 1.442695
            %v1150 = vpow.pop %v1149
            %v1151 = vmul.f32 %v664, 1.442695
            %v1152 = vpow.pop %v1151
            %v1153 = vmul.f32 %v667, 1.442695
            %v1154 = vpow.pop %v1153
            %v1155 = vmul.f32 %v670, 1.442695
            %v1156 = vpow.pop %v1155
            %v1157 = vmul.f32 %v673, 1.442695
            %v1158 = vpow.pop %v1157
            %v1159 = vmul.f32 %v676, 1.442695
            %v1160 = vpow.pop %v1159
            %v1161 = vmul.f32 %v679, 1.442695
            %v1162 = vpow.pop %v1161
            %v1163 = vmul.f32 %v682, 1.442695
            %v1164 = vpow.pop %v1163
            %v1165 = vmul.f32 %v685, 1.442695
            %v1166 = vpow.pop %v1165
            %v1167 = vmul.f32 %v688, 1.442695
            %v1168 = vpow.pop %v1167
            %v1169 = vmul.f32 %v691, 1.442695
            %v1170 = vpow.pop %v1169
            %v1171 = vmul.f32 %v694, 1.442695
            %v1172 = vpow.pop %v1171
            %v1173 = vsub.f32 %v1142, 1.0
            %v1174 = vsub.f32 %v1144, 1.0
            %v1175 = vsub.f32 %v1146, 1.0
            %v1176 = vsub.f32 %v1148, 1.0
            %v1177 = vsub.f32 %v1150, 1.0
            %v1178 = vsub.f32 %v1152, 1.0
            %v1179 = vsub.f32 %v1154, 1.0
            %v1180 = vsub.f32 %v1156, 1.0
            %v1181 = vsub.f32 %v1158, 1.0
            %v1182 = vsub.f32 %v1160, 1.0
            %v1183 = vsub.f32 %v1162, 1.0
            %v1184 = vsub.f32 %v1164, 1.0
            %v1185 = vsub.f32 %v1166, 1.0
            %v1186 = vsub.f32 %v1168, 1.0
            %v1187 = vsub.f32 %v1170, 1.0
            %v1188 = vsub.f32 %v1172, 1.0
            %v1189 = vsel %vm1125, %v649, %v1173
            %v1190 = vsel %vm1126, %v652, %v1174
            %v1191 = vsel %vm1127, %v655, %v1175
            %v1192 = vsel %vm1128, %v658, %v1176
            %v1193 = vsel %vm1129, %v661, %v1177
            %v1194 = vsel %vm1130, %v664, %v1178
            %v1195 = vsel %vm1131, %v667, %v1179
            %v1196 = vsel %vm1132, %v670, %v1180
            %v1197 = vsel %vm1133, %v673, %v1181
            %v1198 = vsel %vm1134, %v676, %v1182
            %v1199 = vsel %vm1135, %v679, %v1183
            %v1200 = vsel %vm1136, %v682, %v1184
            %v1201 = vsel %vm1137, %v685, %v1185
            %v1202 = vsel %vm1138, %v688, %v1186
            %v1203 = vsel %vm1139, %v691, %v1187
            %v1204 = vsel %vm1140, %v694, %v1188
            %s1205 = scalar_lea.vmem [#allocation3], %s383
            %1206 = vst [vmem:[%s1205] sm:$0xff] %v1189
            %1207 = vst [vmem:[%s1205 + $0x8] sm:$0xff] %v1190
            %1208 = vst [vmem:[%s1205 + $0x10] sm:$0xff] %v1191
            %1209 = vst [vmem:[%s1205 + $0x18] sm:$0xff] %v1192
            %1210 = vst [vmem:[%s1205 + $0x20] sm:$0xff] %v1193
            %1211 = vst [vmem:[%s1205 + $0x28] sm:$0xff] %v1194
            %1212 = vst [vmem:[%s1205 + $0x30] sm:$0xff] %v1195
            %1213 = vst [vmem:[%s1205 + $0x38] sm:$0xff] %v1196
            %1214 = vst [vmem:[%s1205 + $0x40] sm:$0xff] %v1197
            %1215 = vst [vmem:[%s1205 + $0x48] sm:$0xff] %v1198
            %1216 = vst [vmem:[%s1205 + $0x50] sm:$0xff] %v1199
            %1217 = vst [vmem:[%s1205 + $0x58] sm:$0xff] %v1200
            %1218 = vst [vmem:[%s1205 + $0x60] sm:$0xff] %v1201
            %1219 = vst [vmem:[%s1205 + $0x68] sm:$0xff] %v1202
            %1220 = vst [vmem:[%s1205 + $0x70] sm:$0xff] %v1203
            %1221 = vst [vmem:[%s1205 + $0x78] sm:$0xff] %v1204
          $region64: #{tpu_custom_call.1} parent=51 // pred_fallthru
            _
          %p1222 = scmp.eq.s32.totalorder %s29, 3
          // Predicated region
          $region65: #{tpu_custom_call.1} parent=51 // pred_check
            %p1223 = pneg %p1222
          $region66: #{tpu_custom_call.1} parent=51 // pred_check_branch
            %1225 = sbr.rel (%p1223) target = $region68
          $region67: #{tpu_custom_call.1} parent=51 // pred_region
            %vm1226 = vcmp.gt.f32.partialorder %v649, 0.0
            %vm1227 = vcmp.gt.f32.partialorder %v652, 0.0
            %vm1228 = vcmp.gt.f32.partialorder %v655, 0.0
            %vm1229 = vcmp.gt.f32.partialorder %v658, 0.0
            %vm1230 = vcmp.gt.f32.partialorder %v661, 0.0
            %vm1231 = vcmp.gt.f32.partialorder %v664, 0.0
            %vm1232 = vcmp.gt.f32.partialorder %v667, 0.0
            %vm1233 = vcmp.gt.f32.partialorder %v670, 0.0
            %vm1234 = vcmp.gt.f32.partialorder %v673, 0.0
            %vm1235 = vcmp.gt.f32.partialorder %v676, 0.0
            %vm1236 = vcmp.gt.f32.partialorder %v679, 0.0
            %vm1237 = vcmp.gt.f32.partialorder %v682, 0.0
            %vm1238 = vcmp.gt.f32.partialorder %v685, 0.0
            %vm1239 = vcmp.gt.f32.partialorder %v688, 0.0
            %vm1240 = vcmp.gt.f32.partialorder %v691, 0.0
            %vm1241 = vcmp.gt.f32.partialorder %v694, 0.0
            %v1242 = vmul.f32 %v649, 0.01
            %v1243 = vmul.f32 %v652, 0.01
            %v1244 = vmul.f32 %v655, 0.01
            %v1245 = vmul.f32 %v658, 0.01
            %v1246 = vmul.f32 %v661, 0.01
            %v1247 = vmul.f32 %v664, 0.01
            %v1248 = vmul.f32 %v667, 0.01
            %v1249 = vmul.f32 %v670, 0.01
            %v1250 = vmul.f32 %v673, 0.01
            %v1251 = vmul.f32 %v676, 0.01
            %v1252 = vmul.f32 %v679, 0.01
            %v1253 = vmul.f32 %v682, 0.01
            %v1254 = vmul.f32 %v685, 0.01
            %v1255 = vmul.f32 %v688, 0.01
            %v1256 = vmul.f32 %v691, 0.01
            %v1257 = vmul.f32 %v694, 0.01
            %v1258 = vsel %vm1226, %v649, %v1242
            %v1259 = vsel %vm1227, %v652, %v1243
            %v1260 = vsel %vm1228, %v655, %v1244
            %v1261 = vsel %vm1229, %v658, %v1245
            %v1262 = vsel %vm1230, %v661, %v1246
            %v1263 = vsel %vm1231, %v664, %v1247
            %v1264 = vsel %vm1232, %v667, %v1248
            %v1265 = vsel %vm1233, %v670, %v1249
            %v1266 = vsel %vm1234, %v673, %v1250
            %v1267 = vsel %vm1235, %v676, %v1251
            %v1268 = vsel %vm1236, %v679, %v1252
            %v1269 = vsel %vm1237, %v682, %v1253
            %v1270 = vsel %vm1238, %v685, %v1254
            %v1271 = vsel %vm1239, %v688, %v1255
            %v1272 = vsel %vm1240, %v691, %v1256
            %v1273 = vsel %vm1241, %v694, %v1257
            %s1274 = scalar_lea.vmem [#allocation3], %s383
            %1275 = vst [vmem:[%s1274] sm:$0xff] %v1258
            %1276 = vst [vmem:[%s1274 + $0x8] sm:$0xff] %v1259
            %1277 = vst [vmem:[%s1274 + $0x10] sm:$0xff] %v1260
            %1278 = vst [vmem:[%s1274 + $0x18] sm:$0xff] %v1261
            %1279 = vst [vmem:[%s1274 + $0x20] sm:$0xff] %v1262
            %1280 = vst [vmem:[%s1274 + $0x28] sm:$0xff] %v1263
            %1281 = vst [vmem:[%s1274 + $0x30] sm:$0xff] %v1264
            %1282 = vst [vmem:[%s1274 + $0x38] sm:$0xff] %v1265
            %1283 = vst [vmem:[%s1274 + $0x40] sm:$0xff] %v1266
            %1284 = vst [vmem:[%s1274 + $0x48] sm:$0xff] %v1267
            %1285 = vst [vmem:[%s1274 + $0x50] sm:$0xff] %v1268
            %1286 = vst [vmem:[%s1274 + $0x58] sm:$0xff] %v1269
            %1287 = vst [vmem:[%s1274 + $0x60] sm:$0xff] %v1270
            %1288 = vst [vmem:[%s1274 + $0x68] sm:$0xff] %v1271
            %1289 = vst [vmem:[%s1274 + $0x70] sm:$0xff] %v1272
            %1290 = vst [vmem:[%s1274 + $0x78] sm:$0xff] %v1273
          $region68: #{tpu_custom_call.1} parent=51 // pred_fallthru
            _
        $region52: #{tpu_custom_call.1} parent=31 // pred_fallthru
          _
        %p1291 = scmp.eq.s32.totalorder %s395, 1
        // Predicated region
        $region69: #{tpu_custom_call.1} parent=31 // pred_check
          %p1292 = pneg %p1291
        $region70: #{tpu_custom_call.1} parent=31 // pred_check_branch
          %1294 = sbr.rel (%p1292) target = $region72
        $region71: #{tpu_custom_call.1} parent=31 // pred_region
          %s1295 = sshra.s32 %s383, 3
          %s1296 = sand.u32 %s383, 7
          %s1297 = smul.u32 %s1295, 2
          %s1298 = smul.addr %s1297, 4
          %s1299 = scalar_lea.vmem [#allocation7], %s1298
          %v1300 = vld [vmem:[%s1299] sm:$0xff]
          %v1301 = vld [vmem:[%s1299 + $0x8] sm:$0xff]
          %v1302 = vld [vmem:[%s1299 + $0x10] sm:$0xff]
          %v1303 = vld [vmem:[%s1299 + $0x18] sm:$0xff]
          %v1304 = vld [vmem:[%s1299 + $0x20] sm:$0xff]
          %v1305 = vld [vmem:[%s1299 + $0x28] sm:$0xff]
          %v1306 = vld [vmem:[%s1299 + $0x30] sm:$0xff]
          %v1307 = vld [vmem:[%s1299 + $0x38] sm:$0xff]
          %v1308 = vld [vmem:[%s1299 + $0x40] sm:$0xff]
          %v1309 = vld [vmem:[%s1299 + $0x48] sm:$0xff]
          %v1310 = vld [vmem:[%s1299 + $0x50] sm:$0xff]
          %v1311 = vld [vmem:[%s1299 + $0x58] sm:$0xff]
          %v1312 = vld [vmem:[%s1299 + $0x60] sm:$0xff]
          %v1313 = vld [vmem:[%s1299 + $0x68] sm:$0xff]
          %v1314 = vld [vmem:[%s1299 + $0x70] sm:$0xff]
          %v1315 = vld [vmem:[%s1299 + $0x78] sm:$0xff]
          %v1316 = vunpack.c.l.bf16 %v1300
          %v1317 = vunpack.c.h.bf16 %v1300
          %v1318 = vunpack.c.l.bf16 %v1301
          %v1319 = vunpack.c.h.bf16 %v1301
          %v1320 = vunpack.c.l.bf16 %v1302
          %v1321 = vunpack.c.h.bf16 %v1302
          %v1322 = vunpack.c.l.bf16 %v1303
          %v1323 = vunpack.c.h.bf16 %v1303
          %v1324 = vunpack.c.l.bf16 %v1304
          %v1325 = vunpack.c.h.bf16 %v1304
          %v1326 = vunpack.c.l.bf16 %v1305
          %v1327 = vunpack.c.h.bf16 %v1305
          %v1328 = vunpack.c.l.bf16 %v1306
          %v1329 = vunpack.c.h.bf16 %v1306
          %v1330 = vunpack.c.l.bf16 %v1307
          %v1331 = vunpack.c.h.bf16 %v1307
          %v1332 = vunpack.c.l.bf16 %v1308
          %v1333 = vunpack.c.h.bf16 %v1308
          %v1334 = vunpack.c.l.bf16 %v1309
          %v1335 = vunpack.c.h.bf16 %v1309
          %v1336 = vunpack.c.l.bf16 %v1310
          %v1337 = vunpack.c.h.bf16 %v1310
          %v1338 = vunpack.c.l.bf16 %v1311
          %v1339 = vunpack.c.h.bf16 %v1311
          %v1340 = vunpack.c.l.bf16 %v1312
          %v1341 = vunpack.c.h.bf16 %v1312
          %v1342 = vunpack.c.l.bf16 %v1313
          %v1343 = vunpack.c.h.bf16 %v1313
          %v1344 = vunpack.c.l.bf16 %v1314
          %v1345 = vunpack.c.h.bf16 %v1314
          %v1346 = vunpack.c.l.bf16 %v1315
          %v1347 = vunpack.c.h.bf16 %v1315
          %v1348 = vld [vmem:[#allocation3] sm:$0xff]
          %v1349 = vld [vmem:[#allocation3 + $0x8] sm:$0xff]
          %v1350 = vld [vmem:[#allocation3 + $0x10] sm:$0xff]
          %v1351 = vld [vmem:[#allocation3 + $0x18] sm:$0xff]
          %v1352 = vld [vmem:[#allocation3 + $0x20] sm:$0xff]
          %v1353 = vld [vmem:[#allocation3 + $0x28] sm:$0xff]
          %v1354 = vld [vmem:[#allocation3 + $0x30] sm:$0xff]
          %v1355 = vld [vmem:[#allocation3 + $0x38] sm:$0xff]
          %v1356 = vld [vmem:[#allocation3 + $0x40] sm:$0xff]
          %v1357 = vld [vmem:[#allocation3 + $0x48] sm:$0xff]
          %v1358 = vld [vmem:[#allocation3 + $0x50] sm:$0xff]
          %v1359 = vld [vmem:[#allocation3 + $0x58] sm:$0xff]
          %v1360 = vld [vmem:[#allocation3 + $0x60] sm:$0xff]
          %v1361 = vld [vmem:[#allocation3 + $0x68] sm:$0xff]
          %v1362 = vld [vmem:[#allocation3 + $0x70] sm:$0xff]
          %v1363 = vld [vmem:[#allocation3 + $0x78] sm:$0xff]
          %v1364 = vld [vmem:[#allocation3 + $0x80] sm:$0xff]
          %v1365 = vld [vmem:[#allocation3 + $0x88] sm:$0xff]
          %v1366 = vld [vmem:[#allocation3 + $0x90] sm:$0xff]
          %v1367 = vld [vmem:[#allocation3 + $0x98] sm:$0xff]
          %v1368 = vld [vmem:[#allocation3 + $0xa0] sm:$0xff]
          %v1369 = vld [vmem:[#allocation3 + $0xa8] sm:$0xff]
          %v1370 = vld [vmem:[#allocation3 + $0xb0] sm:$0xff]
          %v1371 = vld [vmem:[#allocation3 + $0xb8] sm:$0xff]
          %v1372 = vld [vmem:[#allocation3 + $0xc0] sm:$0xff]
          %v1373 = vld [vmem:[#allocation3 + $0xc8] sm:$0xff]
          %v1374 = vld [vmem:[#allocation3 + $0xd0] sm:$0xff]
          %v1375 = vld [vmem:[#allocation3 + $0xd8] sm:$0xff]
          %v1376 = vld [vmem:[#allocation3 + $0xe0] sm:$0xff]
          %v1377 = vld [vmem:[#allocation3 + $0xe8] sm:$0xff]
          %v1378 = vld [vmem:[#allocation3 + $0xf0] sm:$0xff]
          %v1379 = vld [vmem:[#allocation3 + $0xf8] sm:$0xff]
          %1380 = vmatpush.msra.mxu0 %v1363
          %1381 = vmatpush.msra.mxu0 %v1362
          %1382 = vmatpush.msra.mxu0 %v1361
          %1383 = vmatpush.msra.mxu0 %v1360
          %1384 = vmatpush.msra.mxu0 %v1359
          %1385 = vmatpush.msra.mxu0 %v1358
          %1386 = vmatpush.msra.mxu0 %v1357
          %1387 = vmatpush.msra.mxu0 %v1356
          %1388 = vmatpush.msra.mxu0 %v1355
          %1389 = vmatpush.msra.mxu0 %v1354
          %1390 = vmatpush.msra.mxu0 %v1353
          %1391 = vmatpush.msra.mxu0 %v1352
          %1392 = vmatpush.msra.mxu0 %v1351
          %1393 = vmatpush.msra.mxu0 %v1350
          %1394 = vmatpush.msra.mxu0 %v1349
          %1395 = vmatpush.msra.mxu0 %v1348
          %1396 = vmatmul.f32.gmra.mxu0 %v1316
          %v1397 = vpop.f32.mrf.mxu0
          %v1398 = vadd.f32 0.0, %v1397
          %1399 = vmatmul.f32.gmra.mxu0 %v1318
          %v1400 = vpop.f32.mrf.mxu0
          %v1401 = vadd.f32 0.0, %v1400
          %1402 = vmatmul.f32.gmra.mxu0 %v1320
          %v1403 = vpop.f32.mrf.mxu0
          %v1404 = vadd.f32 0.0, %v1403
          %1405 = vmatmul.f32.gmra.mxu0 %v1322
          %v1406 = vpop.f32.mrf.mxu0
          %v1407 = vadd.f32 0.0, %v1406
          %1408 = vmatmul.f32.gmra.mxu0 %v1324
          %v1409 = vpop.f32.mrf.mxu0
          %v1410 = vadd.f32 0.0, %v1409
          %1411 = vmatmul.f32.gmra.mxu0 %v1326
          %v1412 = vpop.f32.mrf.mxu0
          %v1413 = vadd.f32 0.0, %v1412
          %1414 = vmatmul.f32.gmra.mxu0 %v1328
          %v1415 = vpop.f32.mrf.mxu0
          %v1416 = vadd.f32 0.0, %v1415
          %1417 = vmatmul.f32.gmra.mxu0 %v1330
          %v1418 = vpop.f32.mrf.mxu0
          %v1419 = vadd.f32 0.0, %v1418
          %1420 = vmatmul.f32.gmra.mxu0 %v1332
          %v1421 = vpop.f32.mrf.mxu0
          %v1422 = vadd.f32 0.0, %v1421
          %1423 = vmatmul.f32.gmra.mxu0 %v1334
          %v1424 = vpop.f32.mrf.mxu0
          %v1425 = vadd.f32 0.0, %v1424
          %1426 = vmatmul.f32.gmra.mxu0 %v1336
          %v1427 = vpop.f32.mrf.mxu0
          %v1428 = vadd.f32 0.0, %v1427
          %1429 = vmatmul.f32.gmra.mxu0 %v1338
          %v1430 = vpop.f32.mrf.mxu0
          %v1431 = vadd.f32 0.0, %v1430
          %1432 = vmatmul.f32.gmra.mxu0 %v1340
          %v1433 = vpop.f32.mrf.mxu0
          %v1434 = vadd.f32 0.0, %v1433
          %1435 = vmatmul.f32.gmra.mxu0 %v1342
          %v1436 = vpop.f32.mrf.mxu0
          %v1437 = vadd.f32 0.0, %v1436
          %1438 = vmatmul.f32.gmra.mxu0 %v1344
          %v1439 = vpop.f32.mrf.mxu0
          %v1440 = vadd.f32 0.0, %v1439
          %1441 = vmatmul.f32.gmra.mxu0 %v1346
          %v1442 = vpop.f32.mrf.mxu0
          %v1443 = vadd.f32 0.0, %v1442
          %1444 = vdwg.mxu0
          %1445 = vmatpush.msra.mxu0 %v1379
          %1446 = vmatpush.msra.mxu0 %v1378
          %1447 = vmatpush.msra.mxu0 %v1377
          %1448 = vmatpush.msra.mxu0 %v1376
          %1449 = vmatpush.msra.mxu0 %v1375
          %1450 = vmatpush.msra.mxu0 %v1374
          %1451 = vmatpush.msra.mxu0 %v1373
          %1452 = vmatpush.msra.mxu0 %v1372
          %1453 = vmatpush.msra.mxu0 %v1371
          %1454 = vmatpush.msra.mxu0 %v1370
          %1455 = vmatpush.msra.mxu0 %v1369
          %1456 = vmatpush.msra.mxu0 %v1368
          %1457 = vmatpush.msra.mxu0 %v1367
          %1458 = vmatpush.msra.mxu0 %v1366
          %1459 = vmatpush.msra.mxu0 %v1365
          %1460 = vmatpush.msra.mxu0 %v1364
          %1461 = vmatmul.f32.gmra.mxu0 %v1317
          %v1462 = vpop.f32.mrf.mxu0
          %v1463 = vadd.f32 %v1398, %v1462
          %1464 = vmatmul.f32.gmra.mxu0 %v1319
          %v1465 = vpop.f32.mrf.mxu0
          %v1466 = vadd.f32 %v1401, %v1465
          %1467 = vmatmul.f32.gmra.mxu0 %v1321
          %v1468 = vpop.f32.mrf.mxu0
          %v1469 = vadd.f32 %v1404, %v1468
          %1470 = vmatmul.f32.gmra.mxu0 %v1323
          %v1471 = vpop.f32.mrf.mxu0
          %v1472 = vadd.f32 %v1407, %v1471
          %1473 = vmatmul.f32.gmra.mxu0 %v1325
          %v1474 = vpop.f32.mrf.mxu0
          %v1475 = vadd.f32 %v1410, %v1474
          %1476 = vmatmul.f32.gmra.mxu0 %v1327
          %v1477 = vpop.f32.mrf.mxu0
          %v1478 = vadd.f32 %v1413, %v1477
          %1479 = vmatmul.f32.gmra.mxu0 %v1329
          %v1480 = vpop.f32.mrf.mxu0
          %v1481 = vadd.f32 %v1416, %v1480
          %1482 = vmatmul.f32.gmra.mxu0 %v1331
          %v1483 = vpop.f32.mrf.mxu0
          %v1484 = vadd.f32 %v1419, %v1483
          %1485 = vmatmul.f32.gmra.mxu0 %v1333
          %v1486 = vpop.f32.mrf.mxu0
          %v1487 = vadd.f32 %v1422, %v1486
          %1488 = vmatmul.f32.gmra.mxu0 %v1335
          %v1489 = vpop.f32.mrf.mxu0
          %v1490 = vadd.f32 %v1425, %v1489
          %1491 = vmatmul.f32.gmra.mxu0 %v1337
          %v1492 = vpop.f32.mrf.mxu0
          %v1493 = vadd.f32 %v1428, %v1492
          %1494 = vmatmul.f32.gmra.mxu0 %v1339
          %v1495 = vpop.f32.mrf.mxu0
          %v1496 = vadd.f32 %v1431, %v1495
          %1497 = vmatmul.f32.gmra.mxu0 %v1341
          %v1498 = vpop.f32.mrf.mxu0
          %v1499 = vadd.f32 %v1434, %v1498
          %1500 = vmatmul.f32.gmra.mxu0 %v1343
          %v1501 = vpop.f32.mrf.mxu0
          %v1502 = vadd.f32 %v1437, %v1501
          %1503 = vmatmul.f32.gmra.mxu0 %v1345
          %v1504 = vpop.f32.mrf.mxu0
          %v1505 = vadd.f32 %v1440, %v1504
          %1506 = vmatmul.f32.gmra.mxu0 %v1347
          %v1507 = vpop.f32.mrf.mxu0
          %v1508 = vadd.f32 %v1443, %v1507
          %1509 = vdwg.mxu0
          %v1510 = vld [vmem:[%s272] sm:$0xff]
          %v1511 = vld [vmem:[%s272 + $0x8] sm:$0xff]
          %v1512 = vld [vmem:[%s272 + $0x10] sm:$0xff]
          %v1513 = vld [vmem:[%s272 + $0x18] sm:$0xff]
          %v1514 = vld [vmem:[%s272 + $0x20] sm:$0xff]
          %v1515 = vld [vmem:[%s272 + $0x28] sm:$0xff]
          %v1516 = vld [vmem:[%s272 + $0x30] sm:$0xff]
          %v1517 = vld [vmem:[%s272 + $0x38] sm:$0xff]
          %v1518 = vld [vmem:[%s272 + $0x40] sm:$0xff]
          %v1519 = vld [vmem:[%s272 + $0x48] sm:$0xff]
          %v1520 = vld [vmem:[%s272 + $0x50] sm:$0xff]
          %v1521 = vld [vmem:[%s272 + $0x58] sm:$0xff]
          %v1522 = vld [vmem:[%s272 + $0x60] sm:$0xff]
          %v1523 = vld [vmem:[%s272 + $0x68] sm:$0xff]
          %v1524 = vld [vmem:[%s272 + $0x70] sm:$0xff]
          %v1525 = vld [vmem:[%s272 + $0x78] sm:$0xff]
          %1526 = vmatpush.msra.mxu0 %v1525
          %1527 = vmatpush.msra.mxu0 %v1524
          %1528 = vmatpush.msra.mxu0 %v1523
          %1529 = vmatpush.msra.mxu0 %v1522
          %1530 = vmatpush.msra.mxu0 %v1521
          %1531 = vmatpush.msra.mxu0 %v1520
          %1532 = vmatpush.msra.mxu0 %v1519
          %1533 = vmatpush.msra.mxu0 %v1518
          %1534 = vmatpush.msra.mxu0 %v1517
          %1535 = vmatpush.msra.mxu0 %v1516
          %1536 = vmatpush.msra.mxu0 %v1515
          %1537 = vmatpush.msra.mxu0 %v1514
          %1538 = vmatpush.msra.mxu0 %v1513
          %1539 = vmatpush.msra.mxu0 %v1512
          %1540 = vmatpush.msra.mxu0 %v1511
          %1541 = vmatpush.msra.mxu0 %v1510
          %1542 = vmatmul.f32.gmra.mxu0 %v1463
          %v1543 = vpop.f32.mrf.mxu0
          %v1544 = vadd.f32 0.0, %v1543
          %1545 = vmatmul.f32.gmra.mxu0 %v1466
          %v1546 = vpop.f32.mrf.mxu0
          %v1547 = vadd.f32 0.0, %v1546
          %1548 = vmatmul.f32.gmra.mxu0 %v1469
          %v1549 = vpop.f32.mrf.mxu0
          %v1550 = vadd.f32 0.0, %v1549
          %1551 = vmatmul.f32.gmra.mxu0 %v1472
          %v1552 = vpop.f32.mrf.mxu0
          %v1553 = vadd.f32 0.0, %v1552
          %1554 = vmatmul.f32.gmra.mxu0 %v1475
          %v1555 = vpop.f32.mrf.mxu0
          %v1556 = vadd.f32 0.0, %v1555
          %1557 = vmatmul.f32.gmra.mxu0 %v1478
          %v1558 = vpop.f32.mrf.mxu0
          %v1559 = vadd.f32 0.0, %v1558
          %1560 = vmatmul.f32.gmra.mxu0 %v1481
          %v1561 = vpop.f32.mrf.mxu0
          %v1562 = vadd.f32 0.0, %v1561
          %1563 = vmatmul.f32.gmra.mxu0 %v1484
          %v1564 = vpop.f32.mrf.mxu0
          %v1565 = vadd.f32 0.0, %v1564
          %1566 = vmatmul.f32.gmra.mxu0 %v1487
          %v1567 = vpop.f32.mrf.mxu0
          %v1568 = vadd.f32 0.0, %v1567
          %1569 = vmatmul.f32.gmra.mxu0 %v1490
          %v1570 = vpop.f32.mrf.mxu0
          %v1571 = vadd.f32 0.0, %v1570
          %1572 = vmatmul.f32.gmra.mxu0 %v1493
          %v1573 = vpop.f32.mrf.mxu0
          %v1574 = vadd.f32 0.0, %v1573
          %1575 = vmatmul.f32.gmra.mxu0 %v1496
          %v1576 = vpop.f32.mrf.mxu0
          %v1577 = vadd.f32 0.0, %v1576
          %1578 = vmatmul.f32.gmra.mxu0 %v1499
          %v1579 = vpop.f32.mrf.mxu0
          %v1580 = vadd.f32 0.0, %v1579
          %1581 = vmatmul.f32.gmra.mxu0 %v1502
          %v1582 = vpop.f32.mrf.mxu0
          %v1583 = vadd.f32 0.0, %v1582
          %1584 = vmatmul.f32.gmra.mxu0 %v1505
          %v1585 = vpop.f32.mrf.mxu0
          %v1586 = vadd.f32 0.0, %v1585
          %1587 = vmatmul.f32.gmra.mxu0 %v1508
          %v1588 = vpop.f32.mrf.mxu0
          %v1589 = vadd.f32 0.0, %v1588
          %1590 = vdwg.mxu0
          %1591 = vst [vmem:[%s295] sm:$0xff] %v1463
          %1592 = vst [vmem:[%s295 + $0x8] sm:$0xff] %v1466
          %1593 = vst [vmem:[%s295 + $0x10] sm:$0xff] %v1469
          %1594 = vst [vmem:[%s295 + $0x18] sm:$0xff] %v1472
          %1595 = vst [vmem:[%s295 + $0x20] sm:$0xff] %v1475
          %1596 = vst [vmem:[%s295 + $0x28] sm:$0xff] %v1478
          %1597 = vst [vmem:[%s295 + $0x30] sm:$0xff] %v1481
          %1598 = vst [vmem:[%s295 + $0x38] sm:$0xff] %v1484
          %1599 = vst [vmem:[%s295 + $0x40] sm:$0xff] %v1487
          %1600 = vst [vmem:[%s295 + $0x48] sm:$0xff] %v1490
          %1601 = vst [vmem:[%s295 + $0x50] sm:$0xff] %v1493
          %1602 = vst [vmem:[%s295 + $0x58] sm:$0xff] %v1496
          %1603 = vst [vmem:[%s295 + $0x60] sm:$0xff] %v1499
          %1604 = vst [vmem:[%s295 + $0x68] sm:$0xff] %v1502
          %1605 = vst [vmem:[%s295 + $0x70] sm:$0xff] %v1505
          %1606 = vst [vmem:[%s295 + $0x78] sm:$0xff] %v1508
          %1607 = vst [vmem:[%s302] sm:$0xff] %v1544
          %1608 = vst [vmem:[%s302 + $0x8] sm:$0xff] %v1547
          %1609 = vst [vmem:[%s302 + $0x10] sm:$0xff] %v1550
          %1610 = vst [vmem:[%s302 + $0x18] sm:$0xff] %v1553
          %1611 = vst [vmem:[%s302 + $0x20] sm:$0xff] %v1556
          %1612 = vst [vmem:[%s302 + $0x28] sm:$0xff] %v1559
          %1613 = vst [vmem:[%s302 + $0x30] sm:$0xff] %v1562
          %1614 = vst [vmem:[%s302 + $0x38] sm:$0xff] %v1565
          %1615 = vst [vmem:[%s302 + $0x40] sm:$0xff] %v1568
          %1616 = vst [vmem:[%s302 + $0x48] sm:$0xff] %v1571
          %1617 = vst [vmem:[%s302 + $0x50] sm:$0xff] %v1574
          %1618 = vst [vmem:[%s302 + $0x58] sm:$0xff] %v1577
          %1619 = vst [vmem:[%s302 + $0x60] sm:$0xff] %v1580
          %1620 = vst [vmem:[%s302 + $0x68] sm:$0xff] %v1583
          %1621 = vst [vmem:[%s302 + $0x70] sm:$0xff] %v1586
          %1622 = vst [vmem:[%s302 + $0x78] sm:$0xff] %v1589
          %v1623 = vxor.u32 %v1544, 2147483648
          %v1624 = vxor.u32 %v1547, 2147483648
          %v1625 = vxor.u32 %v1550, 2147483648
          %v1626 = vxor.u32 %v1553, 2147483648
          %v1627 = vxor.u32 %v1556, 2147483648
          %v1628 = vxor.u32 %v1559, 2147483648
          %v1629 = vxor.u32 %v1562, 2147483648
          %v1630 = vxor.u32 %v1565, 2147483648
          %v1631 = vxor.u32 %v1568, 2147483648
          %v1632 = vxor.u32 %v1571, 2147483648
          %v1633 = vxor.u32 %v1574, 2147483648
          %v1634 = vxor.u32 %v1577, 2147483648
          %v1635 = vxor.u32 %v1580, 2147483648
          %v1636 = vxor.u32 %v1583, 2147483648
          %v1637 = vxor.u32 %v1586, 2147483648
          %v1638 = vxor.u32 %v1589, 2147483648
          %v1639 = vmul.f32 %v1623, 1.442695
          %v1640 = vpow.pop %v1639
          %v1641 = vmul.f32 %v1624, 1.442695
          %v1642 = vpow.pop %v1641
          %v1643 = vmul.f32 %v1625, 1.442695
          %v1644 = vpow.pop %v1643
          %v1645 = vmul.f32 %v1626, 1.442695
          %v1646 = vpow.pop %v1645
          %v1647 = vmul.f32 %v1627, 1.442695
          %v1648 = vpow.pop %v1647
          %v1649 = vmul.f32 %v1628, 1.442695
          %v1650 = vpow.pop %v1649
          %v1651 = vmul.f32 %v1629, 1.442695
          %v1652 = vpow.pop %v1651
          %v1653 = vmul.f32 %v1630, 1.442695
          %v1654 = vpow.pop %v1653
          %v1655 = vmul.f32 %v1631, 1.442695
          %v1656 = vpow.pop %v1655
          %v1657 = vmul.f32 %v1632, 1.442695
          %v1658 = vpow.pop %v1657
          %v1659 = vmul.f32 %v1633, 1.442695
          %v1660 = vpow.pop %v1659
          %v1661 = vmul.f32 %v1634, 1.442695
          %v1662 = vpow.pop %v1661
          %v1663 = vmul.f32 %v1635, 1.442695
          %v1664 = vpow.pop %v1663
          %v1665 = vmul.f32 %v1636, 1.442695
          %v1666 = vpow.pop %v1665
          %v1667 = vmul.f32 %v1637, 1.442695
          %v1668 = vpow.pop %v1667
          %v1669 = vmul.f32 %v1638, 1.442695
          %v1670 = vpow.pop %v1669
          %v1671 = vadd.f32 %v1640, 1.0
          %v1672 = vadd.f32 %v1642, 1.0
          %v1673 = vadd.f32 %v1644, 1.0
          %v1674 = vadd.f32 %v1646, 1.0
          %v1675 = vadd.f32 %v1648, 1.0
          %v1676 = vadd.f32 %v1650, 1.0
          %v1677 = vadd.f32 %v1652, 1.0
          %v1678 = vadd.f32 %v1654, 1.0
          %v1679 = vadd.f32 %v1656, 1.0
          %v1680 = vadd.f32 %v1658, 1.0
          %v1681 = vadd.f32 %v1660, 1.0
          %v1682 = vadd.f32 %v1662, 1.0
          %v1683 = vadd.f32 %v1664, 1.0
          %v1684 = vadd.f32 %v1666, 1.0
          %v1685 = vadd.f32 %v1668, 1.0
          %v1686 = vadd.f32 %v1670, 1.0
          %v1687 = vrcp.pop %v1671
          %v1688 = vmul.f32 %v1671, %v1687
          %v1689 = vsub.f32 1.0, %v1688
          %v1690 = vmul.f32 %v1687, %v1689
          %v1691 = vadd.f32 %v1687, %v1690
          %vm1692 = vweird.f32 %v1671
          %vm1693 = vweird.f32 %v1687
          %vm1694 = vmor %vm1692, %vm1693
          %v1695 = vsel %vm1694, %v1687, %v1691
          %v1696 = vand.u32 2147483647, %v1671
          %vm1697 = vcmp.eq.f32.partialorder %v1696, 8.507059e+37
          %v1698 = vand.u32 %v1671, 2147483648
          %v1699 = vor.u32 1.1754944e-38, %v1698
          %v1700 = vsel %vm1697, %v1699, %v1695
          %v1701 = vmul.f32 1.0, %v1700
          %v1702 = vrcp.pop %v1672
          %v1703 = vmul.f32 %v1672, %v1702
          %v1704 = vsub.f32 1.0, %v1703
          %v1705 = vmul.f32 %v1702, %v1704
          %v1706 = vadd.f32 %v1702, %v1705
          %vm1707 = vweird.f32 %v1672
          %vm1708 = vweird.f32 %v1702
          %vm1709 = vmor %vm1707, %vm1708
          %v1710 = vsel %vm1709, %v1702, %v1706
          %v1711 = vand.u32 2147483647, %v1672
          %vm1712 = vcmp.eq.f32.partialorder %v1711, 8.507059e+37
          %v1713 = vand.u32 %v1672, 2147483648
          %v1714 = vor.u32 1.1754944e-38, %v1713
          %v1715 = vsel %vm1712, %v1714, %v1710
          %v1716 = vmul.f32 1.0, %v1715
          %v1717 = vrcp.pop %v1673
          %v1718 = vmul.f32 %v1673, %v1717
          %v1719 = vsub.f32 1.0, %v1718
          %v1720 = vmul.f32 %v1717, %v1719
          %v1721 = vadd.f32 %v1717, %v1720
          %vm1722 = vweird.f32 %v1673
          %vm1723 = vweird.f32 %v1717
          %vm1724 = vmor %vm1722, %vm1723
          %v1725 = vsel %vm1724, %v1717, %v1721
          %v1726 = vand.u32 2147483647, %v1673
          %vm1727 = vcmp.eq.f32.partialorder %v1726, 8.507059e+37
          %v1728 = vand.u32 %v1673, 2147483648
          %v1729 = vor.u32 1.1754944e-38, %v1728
          %v1730 = vsel %vm1727, %v1729, %v1725
          %v1731 = vmul.f32 1.0, %v1730
          %v1732 = vrcp.pop %v1674
          %v1733 = vmul.f32 %v1674, %v1732
          %v1734 = vsub.f32 1.0, %v1733
          %v1735 = vmul.f32 %v1732, %v1734
          %v1736 = vadd.f32 %v1732, %v1735
          %vm1737 = vweird.f32 %v1674
          %vm1738 = vweird.f32 %v1732
          %vm1739 = vmor %vm1737, %vm1738
          %v1740 = vsel %vm1739, %v1732, %v1736
          %v1741 = vand.u32 2147483647, %v1674
          %vm1742 = vcmp.eq.f32.partialorder %v1741, 8.507059e+37
          %v1743 = vand.u32 %v1674, 2147483648
          %v1744 = vor.u32 1.1754944e-38, %v1743
          %v1745 = vsel %vm1742, %v1744, %v1740
          %v1746 = vmul.f32 1.0, %v1745
          %v1747 = vrcp.pop %v1675
          %v1748 = vmul.f32 %v1675, %v1747
          %v1749 = vsub.f32 1.0, %v1748
          %v1750 = vmul.f32 %v1747, %v1749
          %v1751 = vadd.f32 %v1747, %v1750
          %vm1752 = vweird.f32 %v1675
          %vm1753 = vweird.f32 %v1747
          %vm1754 = vmor %vm1752, %vm1753
          %v1755 = vsel %vm1754, %v1747, %v1751
          %v1756 = vand.u32 2147483647, %v1675
          %vm1757 = vcmp.eq.f32.partialorder %v1756, 8.507059e+37
          %v1758 = vand.u32 %v1675, 2147483648
          %v1759 = vor.u32 1.1754944e-38, %v1758
          %v1760 = vsel %vm1757, %v1759, %v1755
          %v1761 = vmul.f32 1.0, %v1760
          %v1762 = vrcp.pop %v1676
          %v1763 = vmul.f32 %v1676, %v1762
          %v1764 = vsub.f32 1.0, %v1763
          %v1765 = vmul.f32 %v1762, %v1764
          %v1766 = vadd.f32 %v1762, %v1765
          %vm1767 = vweird.f32 %v1676
          %vm1768 = vweird.f32 %v1762
          %vm1769 = vmor %vm1767, %vm1768
          %v1770 = vsel %vm1769, %v1762, %v1766
          %v1771 = vand.u32 2147483647, %v1676
          %vm1772 = vcmp.eq.f32.partialorder %v1771, 8.507059e+37
          %v1773 = vand.u32 %v1676, 2147483648
          %v1774 = vor.u32 1.1754944e-38, %v1773
          %v1775 = vsel %vm1772, %v1774, %v1770
          %v1776 = vmul.f32 1.0, %v1775
          %v1777 = vrcp.pop %v1677
          %v1778 = vmul.f32 %v1677, %v1777
          %v1779 = vsub.f32 1.0, %v1778
          %v1780 = vmul.f32 %v1777, %v1779
          %v1781 = vadd.f32 %v1777, %v1780
          %vm1782 = vweird.f32 %v1677
          %vm1783 = vweird.f32 %v1777
          %vm1784 = vmor %vm1782, %vm1783
          %v1785 = vsel %vm1784, %v1777, %v1781
          %v1786 = vand.u32 2147483647, %v1677
          %vm1787 = vcmp.eq.f32.partialorder %v1786, 8.507059e+37
          %v1788 = vand.u32 %v1677, 2147483648
          %v1789 = vor.u32 1.1754944e-38, %v1788
          %v1790 = vsel %vm1787, %v1789, %v1785
          %v1791 = vmul.f32 1.0, %v1790
          %v1792 = vrcp.pop %v1678
          %v1793 = vmul.f32 %v1678, %v1792
          %v1794 = vsub.f32 1.0, %v1793
          %v1795 = vmul.f32 %v1792, %v1794
          %v1796 = vadd.f32 %v1792, %v1795
          %vm1797 = vweird.f32 %v1678
          %vm1798 = vweird.f32 %v1792
          %vm1799 = vmor %vm1797, %vm1798
          %v1800 = vsel %vm1799, %v1792, %v1796
          %v1801 = vand.u32 2147483647, %v1678
          %vm1802 = vcmp.eq.f32.partialorder %v1801, 8.507059e+37
          %v1803 = vand.u32 %v1678, 2147483648
          %v1804 = vor.u32 1.1754944e-38, %v1803
          %v1805 = vsel %vm1802, %v1804, %v1800
          %v1806 = vmul.f32 1.0, %v1805
          %v1807 = vrcp.pop %v1679
          %v1808 = vmul.f32 %v1679, %v1807
          %v1809 = vsub.f32 1.0, %v1808
          %v1810 = vmul.f32 %v1807, %v1809
          %v1811 = vadd.f32 %v1807, %v1810
          %vm1812 = vweird.f32 %v1679
          %vm1813 = vweird.f32 %v1807
          %vm1814 = vmor %vm1812, %vm1813
          %v1815 = vsel %vm1814, %v1807, %v1811
          %v1816 = vand.u32 2147483647, %v1679
          %vm1817 = vcmp.eq.f32.partialorder %v1816, 8.507059e+37
          %v1818 = vand.u32 %v1679, 2147483648
          %v1819 = vor.u32 1.1754944e-38, %v1818
          %v1820 = vsel %vm1817, %v1819, %v1815
          %v1821 = vmul.f32 1.0, %v1820
          %v1822 = vrcp.pop %v1680
          %v1823 = vmul.f32 %v1680, %v1822
          %v1824 = vsub.f32 1.0, %v1823
          %v1825 = vmul.f32 %v1822, %v1824
          %v1826 = vadd.f32 %v1822, %v1825
          %vm1827 = vweird.f32 %v1680
          %vm1828 = vweird.f32 %v1822
          %vm1829 = vmor %vm1827, %vm1828
          %v1830 = vsel %vm1829, %v1822, %v1826
          %v1831 = vand.u32 2147483647, %v1680
          %vm1832 = vcmp.eq.f32.partialorder %v1831, 8.507059e+37
          %v1833 = vand.u32 %v1680, 2147483648
          %v1834 = vor.u32 1.1754944e-38, %v1833
          %v1835 = vsel %vm1832, %v1834, %v1830
          %v1836 = vmul.f32 1.0, %v1835
          %v1837 = vrcp.pop %v1681
          %v1838 = vmul.f32 %v1681, %v1837
          %v1839 = vsub.f32 1.0, %v1838
          %v1840 = vmul.f32 %v1837, %v1839
          %v1841 = vadd.f32 %v1837, %v1840
          %vm1842 = vweird.f32 %v1681
          %vm1843 = vweird.f32 %v1837
          %vm1844 = vmor %vm1842, %vm1843
          %v1845 = vsel %vm1844, %v1837, %v1841
          %v1846 = vand.u32 2147483647, %v1681
          %vm1847 = vcmp.eq.f32.partialorder %v1846, 8.507059e+37
          %v1848 = vand.u32 %v1681, 2147483648
          %v1849 = vor.u32 1.1754944e-38, %v1848
          %v1850 = vsel %vm1847, %v1849, %v1845
          %v1851 = vmul.f32 1.0, %v1850
          %v1852 = vrcp.pop %v1682
          %v1853 = vmul.f32 %v1682, %v1852
          %v1854 = vsub.f32 1.0, %v1853
          %v1855 = vmul.f32 %v1852, %v1854
          %v1856 = vadd.f32 %v1852, %v1855
          %vm1857 = vweird.f32 %v1682
          %vm1858 = vweird.f32 %v1852
          %vm1859 = vmor %vm1857, %vm1858
          %v1860 = vsel %vm1859, %v1852, %v1856
          %v1861 = vand.u32 2147483647, %v1682
          %vm1862 = vcmp.eq.f32.partialorder %v1861, 8.507059e+37
          %v1863 = vand.u32 %v1682, 2147483648
          %v1864 = vor.u32 1.1754944e-38, %v1863
          %v1865 = vsel %vm1862, %v1864, %v1860
          %v1866 = vmul.f32 1.0, %v1865
          %v1867 = vrcp.pop %v1683
          %v1868 = vmul.f32 %v1683, %v1867
          %v1869 = vsub.f32 1.0, %v1868
          %v1870 = vmul.f32 %v1867, %v1869
          %v1871 = vadd.f32 %v1867, %v1870
          %vm1872 = vweird.f32 %v1683
          %vm1873 = vweird.f32 %v1867
          %vm1874 = vmor %vm1872, %vm1873
          %v1875 = vsel %vm1874, %v1867, %v1871
          %v1876 = vand.u32 2147483647, %v1683
          %vm1877 = vcmp.eq.f32.partialorder %v1876, 8.507059e+37
          %v1878 = vand.u32 %v1683, 2147483648
          %v1879 = vor.u32 1.1754944e-38, %v1878
          %v1880 = vsel %vm1877, %v1879, %v1875
          %v1881 = vmul.f32 1.0, %v1880
          %v1882 = vrcp.pop %v1684
          %v1883 = vmul.f32 %v1684, %v1882
          %v1884 = vsub.f32 1.0, %v1883
          %v1885 = vmul.f32 %v1882, %v1884
          %v1886 = vadd.f32 %v1882, %v1885
          %vm1887 = vweird.f32 %v1684
          %vm1888 = vweird.f32 %v1882
          %vm1889 = vmor %vm1887, %vm1888
          %v1890 = vsel %vm1889, %v1882, %v1886
          %v1891 = vand.u32 2147483647, %v1684
          %vm1892 = vcmp.eq.f32.partialorder %v1891, 8.507059e+37
          %v1893 = vand.u32 %v1684, 2147483648
          %v1894 = vor.u32 1.1754944e-38, %v1893
          %v1895 = vsel %vm1892, %v1894, %v1890
          %v1896 = vmul.f32 1.0, %v1895
          %v1897 = vrcp.pop %v1685
          %v1898 = vmul.f32 %v1685, %v1897
          %v1899 = vsub.f32 1.0, %v1898
          %v1900 = vmul.f32 %v1897, %v1899
          %v1901 = vadd.f32 %v1897, %v1900
          %vm1902 = vweird.f32 %v1685
          %vm1903 = vweird.f32 %v1897
          %vm1904 = vmor %vm1902, %vm1903
          %v1905 = vsel %vm1904, %v1897, %v1901
          %v1906 = vand.u32 2147483647, %v1685
          %vm1907 = vcmp.eq.f32.partialorder %v1906, 8.507059e+37
          %v1908 = vand.u32 %v1685, 2147483648
          %v1909 = vor.u32 1.1754944e-38, %v1908
          %v1910 = vsel %vm1907, %v1909, %v1905
          %v1911 = vmul.f32 1.0, %v1910
          %v1912 = vrcp.pop %v1686
          %v1913 = vmul.f32 %v1686, %v1912
          %v1914 = vsub.f32 1.0, %v1913
          %v1915 = vmul.f32 %v1912, %v1914
          %v1916 = vadd.f32 %v1912, %v1915
          %vm1917 = vweird.f32 %v1686
          %vm1918 = vweird.f32 %v1912
          %vm1919 = vmor %vm1917, %vm1918
          %v1920 = vsel %vm1919, %v1912, %v1916
          %v1921 = vand.u32 2147483647, %v1686
          %vm1922 = vcmp.eq.f32.partialorder %v1921, 8.507059e+37
          %v1923 = vand.u32 %v1686, 2147483648
          %v1924 = vor.u32 1.1754944e-38, %v1923
          %v1925 = vsel %vm1922, %v1924, %v1920
          %v1926 = vmul.f32 1.0, %v1925
          %1927 = vst [vmem:[%s309] sm:$0xff] %v1701
          %1928 = vst [vmem:[%s309 + $0x8] sm:$0xff] %v1716
          %1929 = vst [vmem:[%s309 + $0x10] sm:$0xff] %v1731
          %1930 = vst [vmem:[%s309 + $0x18] sm:$0xff] %v1746
          %1931 = vst [vmem:[%s309 + $0x20] sm:$0xff] %v1761
          %1932 = vst [vmem:[%s309 + $0x28] sm:$0xff] %v1776
          %1933 = vst [vmem:[%s309 + $0x30] sm:$0xff] %v1791
          %1934 = vst [vmem:[%s309 + $0x38] sm:$0xff] %v1806
          %1935 = vst [vmem:[%s309 + $0x40] sm:$0xff] %v1821
          %1936 = vst [vmem:[%s309 + $0x48] sm:$0xff] %v1836
          %1937 = vst [vmem:[%s309 + $0x50] sm:$0xff] %v1851
          %1938 = vst [vmem:[%s309 + $0x58] sm:$0xff] %v1866
          %1939 = vst [vmem:[%s309 + $0x60] sm:$0xff] %v1881
          %1940 = vst [vmem:[%s309 + $0x68] sm:$0xff] %v1896
          %1941 = vst [vmem:[%s309 + $0x70] sm:$0xff] %v1911
          %1942 = vst [vmem:[%s309 + $0x78] sm:$0xff] %v1926
          // Predicated region
          $region73: #{tpu_custom_call.1} parent=71 // pred_check
            %p1943 = pneg %p313
          $region74: #{tpu_custom_call.1} parent=71 // pred_check_branch
            %1945 = sbr.rel (%p1943) target = $region76
          $region75: #{tpu_custom_call.1} parent=71 // pred_region
            %v1946 = vmax.f32 %v1544, 0.0
            %v1947 = vmax.f32 %v1547, 0.0
            %v1948 = vmax.f32 %v1550, 0.0
            %v1949 = vmax.f32 %v1553, 0.0
            %v1950 = vmax.f32 %v1556, 0.0
            %v1951 = vmax.f32 %v1559, 0.0
            %v1952 = vmax.f32 %v1562, 0.0
            %v1953 = vmax.f32 %v1565, 0.0
            %v1954 = vmax.f32 %v1568, 0.0
            %v1955 = vmax.f32 %v1571, 0.0
            %v1956 = vmax.f32 %v1574, 0.0
            %v1957 = vmax.f32 %v1577, 0.0
            %v1958 = vmax.f32 %v1580, 0.0
            %v1959 = vmax.f32 %v1583, 0.0
            %v1960 = vmax.f32 %v1586, 0.0
            %v1961 = vmax.f32 %v1589, 0.0
            %s1962 = scalar_lea.vmem [#allocation2], %s383
            %1963 = vst [vmem:[%s1962] sm:$0xff] %v1946
            %1964 = vst [vmem:[%s1962 + $0x8] sm:$0xff] %v1947
            %1965 = vst [vmem:[%s1962 + $0x10] sm:$0xff] %v1948
            %1966 = vst [vmem:[%s1962 + $0x18] sm:$0xff] %v1949
            %1967 = vst [vmem:[%s1962 + $0x20] sm:$0xff] %v1950
            %1968 = vst [vmem:[%s1962 + $0x28] sm:$0xff] %v1951
            %1969 = vst [vmem:[%s1962 + $0x30] sm:$0xff] %v1952
            %1970 = vst [vmem:[%s1962 + $0x38] sm:$0xff] %v1953
            %1971 = vst [vmem:[%s1962 + $0x40] sm:$0xff] %v1954
            %1972 = vst [vmem:[%s1962 + $0x48] sm:$0xff] %v1955
            %1973 = vst [vmem:[%s1962 + $0x50] sm:$0xff] %v1956
            %1974 = vst [vmem:[%s1962 + $0x58] sm:$0xff] %v1957
            %1975 = vst [vmem:[%s1962 + $0x60] sm:$0xff] %v1958
            %1976 = vst [vmem:[%s1962 + $0x68] sm:$0xff] %v1959
            %1977 = vst [vmem:[%s1962 + $0x70] sm:$0xff] %v1960
            %1978 = vst [vmem:[%s1962 + $0x78] sm:$0xff] %v1961
          $region76: #{tpu_custom_call.1} parent=71 // pred_fallthru
            _
          %p1979 = scmp.eq.s32.totalorder %s29, 1
          // Predicated region
          $region77: #{tpu_custom_call.1} parent=71 // pred_check
            %p1980 = pneg %p1979
          $region78: #{tpu_custom_call.1} parent=71 // pred_check_branch
            %1982 = sbr.rel (%p1980) target = $region80
          $region79: #{tpu_custom_call.1} parent=71 // pred_region
            %v1983 = vmul.f32 %v1544, %v1701
            %v1984 = vmul.f32 %v1547, %v1716
            %v1985 = vmul.f32 %v1550, %v1731
            %v1986 = vmul.f32 %v1553, %v1746
            %v1987 = vmul.f32 %v1556, %v1761
            %v1988 = vmul.f32 %v1559, %v1776
            %v1989 = vmul.f32 %v1562, %v1791
            %v1990 = vmul.f32 %v1565, %v1806
            %v1991 = vmul.f32 %v1568, %v1821
            %v1992 = vmul.f32 %v1571, %v1836
            %v1993 = vmul.f32 %v1574, %v1851
            %v1994 = vmul.f32 %v1577, %v1866
            %v1995 = vmul.f32 %v1580, %v1881
            %v1996 = vmul.f32 %v1583, %v1896
            %v1997 = vmul.f32 %v1586, %v1911
            %v1998 = vmul.f32 %v1589, %v1926
            %s1999 = scalar_lea.vmem [#allocation2], %s383
            %2000 = vst [vmem:[%s1999] sm:$0xff] %v1983
            %2001 = vst [vmem:[%s1999 + $0x8] sm:$0xff] %v1984
            %2002 = vst [vmem:[%s1999 + $0x10] sm:$0xff] %v1985
            %2003 = vst [vmem:[%s1999 + $0x18] sm:$0xff] %v1986
            %2004 = vst [vmem:[%s1999 + $0x20] sm:$0xff] %v1987
            %2005 = vst [vmem:[%s1999 + $0x28] sm:$0xff] %v1988
            %2006 = vst [vmem:[%s1999 + $0x30] sm:$0xff] %v1989
            %2007 = vst [vmem:[%s1999 + $0x38] sm:$0xff] %v1990
            %2008 = vst [vmem:[%s1999 + $0x40] sm:$0xff] %v1991
            %2009 = vst [vmem:[%s1999 + $0x48] sm:$0xff] %v1992
            %2010 = vst [vmem:[%s1999 + $0x50] sm:$0xff] %v1993
            %2011 = vst [vmem:[%s1999 + $0x58] sm:$0xff] %v1994
            %2012 = vst [vmem:[%s1999 + $0x60] sm:$0xff] %v1995
            %2013 = vst [vmem:[%s1999 + $0x68] sm:$0xff] %v1996
            %2014 = vst [vmem:[%s1999 + $0x70] sm:$0xff] %v1997
            %2015 = vst [vmem:[%s1999 + $0x78] sm:$0xff] %v1998
          $region80: #{tpu_custom_call.1} parent=71 // pred_fallthru
            _
          %p2016 = scmp.eq.s32.totalorder %s29, 2
          // Predicated region
          $region81: #{tpu_custom_call.1} parent=71 // pred_check
            %p2017 = pneg %p2016
          $region82: #{tpu_custom_call.1} parent=71 // pred_check_branch
            %2019 = sbr.rel (%p2017) target = $region84
          $region83: #{tpu_custom_call.1} parent=71 // pred_region
            %vm2020 = vcmp.gt.f32.partialorder %v1544, 0.0
            %vm2021 = vcmp.gt.f32.partialorder %v1547, 0.0
            %vm2022 = vcmp.gt.f32.partialorder %v1550, 0.0
            %vm2023 = vcmp.gt.f32.partialorder %v1553, 0.0
            %vm2024 = vcmp.gt.f32.partialorder %v1556, 0.0
            %vm2025 = vcmp.gt.f32.partialorder %v1559, 0.0
            %vm2026 = vcmp.gt.f32.partialorder %v1562, 0.0
            %vm2027 = vcmp.gt.f32.partialorder %v1565, 0.0
            %vm2028 = vcmp.gt.f32.partialorder %v1568, 0.0
            %vm2029 = vcmp.gt.f32.partialorder %v1571, 0.0
            %vm2030 = vcmp.gt.f32.partialorder %v1574, 0.0
            %vm2031 = vcmp.gt.f32.partialorder %v1577, 0.0
            %vm2032 = vcmp.gt.f32.partialorder %v1580, 0.0
            %vm2033 = vcmp.gt.f32.partialorder %v1583, 0.0
            %vm2034 = vcmp.gt.f32.partialorder %v1586, 0.0
            %vm2035 = vcmp.gt.f32.partialorder %v1589, 0.0
            %v2036 = vmul.f32 %v1544, 1.442695
            %v2037 = vpow.pop %v2036
            %v2038 = vmul.f32 %v1547, 1.442695
            %v2039 = vpow.pop %v2038
            %v2040 = vmul.f32 %v1550, 1.442695
            %v2041 = vpow.pop %v2040
            %v2042 = vmul.f32 %v1553, 1.442695
            %v2043 = vpow.pop %v2042
            %v2044 = vmul.f32 %v1556, 1.442695
            %v2045 = vpow.pop %v2044
            %v2046 = vmul.f32 %v1559, 1.442695
            %v2047 = vpow.pop %v2046
            %v2048 = vmul.f32 %v1562, 1.442695
            %v2049 = vpow.pop %v2048
            %v2050 = vmul.f32 %v1565, 1.442695
            %v2051 = vpow.pop %v2050
            %v2052 = vmul.f32 %v1568, 1.442695
            %v2053 = vpow.pop %v2052
            %v2054 = vmul.f32 %v1571, 1.442695
            %v2055 = vpow.pop %v2054
            %v2056 = vmul.f32 %v1574, 1.442695
            %v2057 = vpow.pop %v2056
            %v2058 = vmul.f32 %v1577, 1.442695
            %v2059 = vpow.pop %v2058
            %v2060 = vmul.f32 %v1580, 1.442695
            %v2061 = vpow.pop %v2060
            %v2062 = vmul.f32 %v1583, 1.442695
            %v2063 = vpow.pop %v2062
            %v2064 = vmul.f32 %v1586, 1.442695
            %v2065 = vpow.pop %v2064
            %v2066 = vmul.f32 %v1589, 1.442695
            %v2067 = vpow.pop %v2066
            %v2068 = vsub.f32 %v2037, 1.0
            %v2069 = vsub.f32 %v2039, 1.0
            %v2070 = vsub.f32 %v2041, 1.0
            %v2071 = vsub.f32 %v2043, 1.0
            %v2072 = vsub.f32 %v2045, 1.0
            %v2073 = vsub.f32 %v2047, 1.0
            %v2074 = vsub.f32 %v2049, 1.0
            %v2075 = vsub.f32 %v2051, 1.0
            %v2076 = vsub.f32 %v2053, 1.0
            %v2077 = vsub.f32 %v2055, 1.0
            %v2078 = vsub.f32 %v2057, 1.0
            %v2079 = vsub.f32 %v2059, 1.0
            %v2080 = vsub.f32 %v2061, 1.0
            %v2081 = vsub.f32 %v2063, 1.0
            %v2082 = vsub.f32 %v2065, 1.0
            %v2083 = vsub.f32 %v2067, 1.0
            %v2084 = vsel %vm2020, %v1544, %v2068
            %v2085 = vsel %vm2021, %v1547, %v2069
            %v2086 = vsel %vm2022, %v1550, %v2070
            %v2087 = vsel %vm2023, %v1553, %v2071
            %v2088 = vsel %vm2024, %v1556, %v2072
            %v2089 = vsel %vm2025, %v1559, %v2073
            %v2090 = vsel %vm2026, %v1562, %v2074
            %v2091 = vsel %vm2027, %v1565, %v2075
            %v2092 = vsel %vm2028, %v1568, %v2076
            %v2093 = vsel %vm2029, %v1571, %v2077
            %v2094 = vsel %vm2030, %v1574, %v2078
            %v2095 = vsel %vm2031, %v1577, %v2079
            %v2096 = vsel %vm2032, %v1580, %v2080
            %v2097 = vsel %vm2033, %v1583, %v2081
            %v2098 = vsel %vm2034, %v1586, %v2082
            %v2099 = vsel %vm2035, %v1589, %v2083
            %s2100 = scalar_lea.vmem [#allocation2], %s383
            %2101 = vst [vmem:[%s2100] sm:$0xff] %v2084
            %2102 = vst [vmem:[%s2100 + $0x8] sm:$0xff] %v2085
            %2103 = vst [vmem:[%s2100 + $0x10] sm:$0xff] %v2086
            %2104 = vst [vmem:[%s2100 + $0x18] sm:$0xff] %v2087
            %2105 = vst [vmem:[%s2100 + $0x20] sm:$0xff] %v2088
            %2106 = vst [vmem:[%s2100 + $0x28] sm:$0xff] %v2089
            %2107 = vst [vmem:[%s2100 + $0x30] sm:$0xff] %v2090
            %2108 = vst [vmem:[%s2100 + $0x38] sm:$0xff] %v2091
            %2109 = vst [vmem:[%s2100 + $0x40] sm:$0xff] %v2092
            %2110 = vst [vmem:[%s2100 + $0x48] sm:$0xff] %v2093
            %2111 = vst [vmem:[%s2100 + $0x50] sm:$0xff] %v2094
            %2112 = vst [vmem:[%s2100 + $0x58] sm:$0xff] %v2095
            %2113 = vst [vmem:[%s2100 + $0x60] sm:$0xff] %v2096
            %2114 = vst [vmem:[%s2100 + $0x68] sm:$0xff] %v2097
            %2115 = vst [vmem:[%s2100 + $0x70] sm:$0xff] %v2098
            %2116 = vst [vmem:[%s2100 + $0x78] sm:$0xff] %v2099
          $region84: #{tpu_custom_call.1} parent=71 // pred_fallthru
            _
          %p2117 = scmp.eq.s32.totalorder %s29, 3
          // Predicated region
          $region85: #{tpu_custom_call.1} parent=71 // pred_check
            %p2118 = pneg %p2117
          $region86: #{tpu_custom_call.1} parent=71 // pred_check_branch
            %2120 = sbr.rel (%p2118) target = $region88
          $region87: #{tpu_custom_call.1} parent=71 // pred_region
            %vm2121 = vcmp.gt.f32.partialorder %v1544, 0.0
            %vm2122 = vcmp.gt.f32.partialorder %v1547, 0.0
            %vm2123 = vcmp.gt.f32.partialorder %v1550, 0.0
            %vm2124 = vcmp.gt.f32.partialorder %v1553, 0.0
            %vm2125 = vcmp.gt.f32.partialorder %v1556, 0.0
            %vm2126 = vcmp.gt.f32.partialorder %v1559, 0.0
            %vm2127 = vcmp.gt.f32.partialorder %v1562, 0.0
            %vm2128 = vcmp.gt.f32.partialorder %v1565, 0.0
            %vm2129 = vcmp.gt.f32.partialorder %v1568, 0.0
            %vm2130 = vcmp.gt.f32.partialorder %v1571, 0.0
            %vm2131 = vcmp.gt.f32.partialorder %v1574, 0.0
            %vm2132 = vcmp.gt.f32.partialorder %v1577, 0.0
            %vm2133 = vcmp.gt.f32.partialorder %v1580, 0.0
            %vm2134 = vcmp.gt.f32.partialorder %v1583, 0.0
            %vm2135 = vcmp.gt.f32.partialorder %v1586, 0.0
            %vm2136 = vcmp.gt.f32.partialorder %v1589, 0.0
            %v2137 = vmul.f32 %v1544, 0.01
            %v2138 = vmul.f32 %v1547, 0.01
            %v2139 = vmul.f32 %v1550, 0.01
            %v2140 = vmul.f32 %v1553, 0.01
            %v2141 = vmul.f32 %v1556, 0.01
            %v2142 = vmul.f32 %v1559, 0.01
            %v2143 = vmul.f32 %v1562, 0.01
            %v2144 = vmul.f32 %v1565, 0.01
            %v2145 = vmul.f32 %v1568, 0.01
            %v2146 = vmul.f32 %v1571, 0.01
            %v2147 = vmul.f32 %v1574, 0.01
            %v2148 = vmul.f32 %v1577, 0.01
            %v2149 = vmul.f32 %v1580, 0.01
            %v2150 = vmul.f32 %v1583, 0.01
            %v2151 = vmul.f32 %v1586, 0.01
            %v2152 = vmul.f32 %v1589, 0.01
            %v2153 = vsel %vm2121, %v1544, %v2137
            %v2154 = vsel %vm2122, %v1547, %v2138
            %v2155 = vsel %vm2123, %v1550, %v2139
            %v2156 = vsel %vm2124, %v1553, %v2140
            %v2157 = vsel %vm2125, %v1556, %v2141
            %v2158 = vsel %vm2126, %v1559, %v2142
            %v2159 = vsel %vm2127, %v1562, %v2143
            %v2160 = vsel %vm2128, %v1565, %v2144
            %v2161 = vsel %vm2129, %v1568, %v2145
            %v2162 = vsel %vm2130, %v1571, %v2146
            %v2163 = vsel %vm2131, %v1574, %v2147
            %v2164 = vsel %vm2132, %v1577, %v2148
            %v2165 = vsel %vm2133, %v1580, %v2149
            %v2166 = vsel %vm2134, %v1583, %v2150
            %v2167 = vsel %vm2135, %v1586, %v2151
            %v2168 = vsel %vm2136, %v1589, %v2152
            %s2169 = scalar_lea.vmem [#allocation2], %s383
            %2170 = vst [vmem:[%s2169] sm:$0xff] %v2153
            %2171 = vst [vmem:[%s2169 + $0x8] sm:$0xff] %v2154
            %2172 = vst [vmem:[%s2169 + $0x10] sm:$0xff] %v2155
            %2173 = vst [vmem:[%s2169 + $0x18] sm:$0xff] %v2156
            %2174 = vst [vmem:[%s2169 + $0x20] sm:$0xff] %v2157
            %2175 = vst [vmem:[%s2169 + $0x28] sm:$0xff] %v2158
            %2176 = vst [vmem:[%s2169 + $0x30] sm:$0xff] %v2159
            %2177 = vst [vmem:[%s2169 + $0x38] sm:$0xff] %v2160
            %2178 = vst [vmem:[%s2169 + $0x40] sm:$0xff] %v2161
            %2179 = vst [vmem:[%s2169 + $0x48] sm:$0xff] %v2162
            %2180 = vst [vmem:[%s2169 + $0x50] sm:$0xff] %v2163
            %2181 = vst [vmem:[%s2169 + $0x58] sm:$0xff] %v2164
            %2182 = vst [vmem:[%s2169 + $0x60] sm:$0xff] %v2165
            %2183 = vst [vmem:[%s2169 + $0x68] sm:$0xff] %v2166
            %2184 = vst [vmem:[%s2169 + $0x70] sm:$0xff] %v2167
            %2185 = vst [vmem:[%s2169 + $0x78] sm:$0xff] %v2168
          $region88: #{tpu_custom_call.1} parent=71 // pred_fallthru
            _
        $region72: #{tpu_custom_call.1} parent=31 // pred_fallthru
          _
        %s2186 = sand.u32 %s115, 1
        %s2187 = scalar_lea.sflag [#allocation6], %s2186
        %s2188 = sand.u32 %s115, 1
        %s2189 = smul.addr %s2188, 128
        %s2190 = scalar_lea.vmem [#allocation10], %s2189
        %s2191 = sand.u32 %s25, 1
        %s2192 = scalar_lea.sflag [#allocation12], %s2191
        %s2193 = sand.u32 %s143, 1
        %s2194 = smul.addr %s2193, 128
        %s2195 = scalar_lea.vmem [#allocation11], %s2194
        %s2196 = sand.u32 %s25, 1
        %s2197 = scalar_lea.sflag [#allocation12], %s2196
        %s2198 = sand.u32 %s169, 1
        %s2199 = smul.addr %s2198, 128
        %s2200 = scalar_lea.vmem [#allocation13], %s2199
        // Predicated region
        $region89: #{tpu_custom_call.1} parent=31 // pred_check
          %p2201 = pneg %p125
        $region90: #{tpu_custom_call.1} parent=31 // pred_check_branch
          %2203 = sbr.rel (%p2201) target = $region92
        $region91: #{tpu_custom_call.1} parent=31 // pred_region
          %s2204 = smul.u32 16, %s30
          %2206 = vsyncadd %s2187, 0
          %s2207 = smul.addr %s29, 32
          %s2208 = sadd.s32 %s2204, %s2207
          %s2209 = smul.addr %s2208, 8
          %s2210 = scalar_lea.hbm %s3, %s2209
          %s2211 = sshll.u32 %s2190, 4
          %s2212 = int_to_ptr.vmem [resolvable:$true] %s2211
          %s2213 = sshll.u32 %s2210, 4
          %s2214 = int_to_ptr.hbm [resolvable:$true] %s2213
          %2219 = dma.vmem_to_hbm [thread:$0]  %s2212, 2048, %s2214, %s2187, 128, 128, 8
        $region92: #{tpu_custom_call.1} parent=31 // pred_fallthru
          _
        // Predicated region
        $region93: #{tpu_custom_call.1} parent=31 // pred_check
          %p2220 = pneg %p153
        $region94: #{tpu_custom_call.1} parent=31 // pred_check_branch
          %2222 = sbr.rel (%p2220) target = $region96
        $region95: #{tpu_custom_call.1} parent=31 // pred_region
          %s2223 = smul.u32 16, %s30
          %2225 = vsyncadd %s2192, 0
          %s2226 = smul.addr %s29, 32
          %s2227 = sadd.s32 %s2223, %s2226
          %s2228 = smul.addr %s2227, 8
          %s2229 = scalar_lea.hbm %s4, %s2228
          %s2230 = sshll.u32 %s2195, 4
          %s2231 = int_to_ptr.vmem [resolvable:$true] %s2230
          %s2232 = sshll.u32 %s2229, 4
          %s2233 = int_to_ptr.hbm [resolvable:$true] %s2232
          %2238 = dma.vmem_to_hbm [thread:$0]  %s2231, 2048, %s2233, %s2192, 128, 128, 8
        $region96: #{tpu_custom_call.1} parent=31 // pred_fallthru
          _
        // Predicated region
        $region97: #{tpu_custom_call.1} parent=31 // pred_check
          %p2239 = pneg %p179
        $region98: #{tpu_custom_call.1} parent=31 // pred_check_branch
          %2241 = sbr.rel (%p2239) target = $region100
        $region99: #{tpu_custom_call.1} parent=31 // pred_region
          %s2242 = smul.u32 16, %s30
          %2244 = vsyncadd %s2197, 0
          %s2245 = smul.addr %s2242, 8
          %s2246 = scalar_lea.hbm %s5, %s2245
          %s2247 = sshll.u32 %s2200, 4
          %s2248 = int_to_ptr.vmem [resolvable:$true] %s2247
          %s2249 = sshll.u32 %s2246, 4
          %s2250 = int_to_ptr.hbm [resolvable:$true] %s2249
          %2255 = dma.vmem_to_hbm [thread:$0]  %s2248, 2048, %s2250, %s2197, 128, 128, 8
        $region100: #{tpu_custom_call.1} parent=31 // pred_fallthru
          _
      $region32: #{tpu_custom_call.1} parent=5 // pred_fallthru
        _
      %p2256 = scmp.le.s32.totalorder 2, %s20
      // Predicated region
      $region101: #{tpu_custom_call.1} parent=5 // pred_check
        %p2257 = pneg %p2256
      $region102: #{tpu_custom_call.1} parent=5 // pred_check_branch
        %2259 = sbr.rel (%p2257) target = $region104
      $region103: #{tpu_custom_call.1} parent=5 // pred_region
        %s2260 = ssub.s32 %s20, 2
        // Predicated region
        $region105: #{tpu_custom_call.1} parent=103 // pred_check
          %p2261 = pneg %p131
        $region106: #{tpu_custom_call.1} parent=103 // pred_check_branch
          %2263 = sbr.rel (%p2261) target = $region108
        $region107: #{tpu_custom_call.1} parent=103 // pred_region
          %s2264 = sand.u32 %s116, 1
          %s2265 = scalar_lea.sflag [#allocation6], %s2264
          %s2266 = sand.u32 %s116, 1
          %s2267 = smul.addr %s2266, 128
          %s2268 = scalar_lea.vmem [#allocation10], %s2267
          %2270 = dma.done %s2265, 2048
        $region108: #{tpu_custom_call.1} parent=103 // pred_fallthru
          _
        // Predicated region
        $region109: #{tpu_custom_call.1} parent=103 // pred_check
          %p2271 = pneg %p159
        $region110: #{tpu_custom_call.1} parent=103 // pred_check_branch
          %2273 = sbr.rel (%p2271) target = $region112
        $region111: #{tpu_custom_call.1} parent=103 // pred_region
          %s2274 = sand.u32 %s26, 1
          %s2275 = scalar_lea.sflag [#allocation12], %s2274
          %s2276 = sand.u32 %s144, 1
          %s2277 = smul.addr %s2276, 128
          %s2278 = scalar_lea.vmem [#allocation11], %s2277
          %2280 = dma.done %s2275, 2048
        $region112: #{tpu_custom_call.1} parent=103 // pred_fallthru
          _
        // Predicated region
        $region113: #{tpu_custom_call.1} parent=103 // pred_check
          %p2281 = pneg %p185
        $region114: #{tpu_custom_call.1} parent=103 // pred_check_branch
          %2283 = sbr.rel (%p2281) target = $region116
        $region115: #{tpu_custom_call.1} parent=103 // pred_region
          %s2284 = sand.u32 %s26, 1
          %s2285 = scalar_lea.sflag [#allocation12], %s2284
          %s2286 = sand.u32 %s170, 1
          %s2287 = smul.addr %s2286, 128
          %s2288 = scalar_lea.vmem [#allocation13], %s2287
          %2290 = dma.done %s2285, 2048
        $region116: #{tpu_custom_call.1} parent=103 // pred_fallthru
          _
      $region104: #{tpu_custom_call.1} parent=5 // pred_fallthru
        _
    $region6: #{tpu_custom_call.1} parent=1 // loop_footer
      %s24 = sadd.s32 1, %s20
    $region7: #{tpu_custom_call.1} parent=1 // loop_footer_branch
      %19 = sbr.rel target = $region3
    $region8: #{tpu_custom_call.1} parent=1 // loop_exit
      _
    %2291 = vsyncpa [#allocation5], 1
    %s2292 = scalar_lea.sflag [#allocation5], 1
    %2293 = vsyncpa %s2292, 1
    %2294 = vsyncpa [#allocation8], 1
    %2295 = vsyncpa [#allocation6], 1
    %s2296 = scalar_lea.sflag [#allocation6], 1
    %2297 = vsyncpa %s2296, 1
    %2298 = vsyncpa [#allocation12], 1
    %s2299 = scalar_lea.sflag [#allocation12], 1
    %2300 = vsyncpa %s2299, 1

</llo_original>
